<compile_context>
chip_gen: v7x
topology: tpu7x:2x2x1
jax: 0.10.0
libtpu: 0.0.40
codegen_flags: <defaults>
</compile_context>

<pallas_src>
import math

import jax
import jax.numpy as jnp
from jax.experimental import pallas as pl
from jax.experimental.pallas import tpu as pltpu

_VMEM_LIMIT = 32 * 1024 * 1024   # fits the scoped-VMEM budget on v5e/v6e/v7x with headroom


# ----------------------------------------------------------------------------
# Small helpers
# ----------------------------------------------------------------------------
def _round_up(x, m):
    return -(-x // m) * m


def _pick_tile(size, target):
    """Largest row tile <= target that divides `size`.

    Prefers multiples of 8 (so non-full blocks satisfy the (8,128) sublane rule);
    if size <= target the full dimension is used (full-dim blocks are always legal)."""
    if size <= target:
        return size
    t = (target // 8) * 8
    while t >= 8:
        if size % t == 0:
            return t
        t -= 8
    return size  # fallback: full-dim block (callers keep these bounded)


def _pad2d_to(x, rp, cp):
    r, c = x.shape
    if (rp, cp) == (r, c):
        return x
    return jnp.pad(x, ((0, rp - r), (0, cp - c)))


def _pad_rows(x, rp):
    r = x.shape[0]
    if rp == r:
        return x
    return jnp.pad(x, ((0, rp - r), (0, 0)))


# ----------------------------------------------------------------------------
# Pallas MXU matmul kernels (convs via im2col, and the FC layer)
# bf16 operands, f32 accumulation, bf16 (or f32) output.
# ----------------------------------------------------------------------------
def _mm_kernel(a_ref, b_ref, o_ref, acc_ref):
    @pl.when(pl.program_id(2) == 0)
    def _():
        acc_ref[...] = jnp.zeros_like(acc_ref)

    acc_ref[...] += jnp.dot(a_ref[...], b_ref[...],
                            preferred_element_type=jnp.float32)

    @pl.when(pl.program_id(2) == pl.num_programs(2) - 1)
    def _():
        o_ref[...] = acc_ref[...].astype(o_ref.dtype)


def _mm_stats_kernel(a_ref, b_ref, o_ref, sum_ref, ssq_ref, acc_ref):
    """Matmul + per-M-tile per-channel sum / sum-of-squares of the f32 result
    (fused BatchNorm statistics pass)."""
    @pl.when(pl.program_id(2) == 0)
    def _():
        acc_ref[...] = jnp.zeros_like(acc_ref)

    acc_ref[...] += jnp.dot(a_ref[...], b_ref[...],
                            preferred_element_type=jnp.float32)

    @pl.when(pl.program_id(2) == pl.num_programs(2) - 1)
    def _():
        y = acc_ref[...]
        o_ref[...] = y.astype(o_ref.dtype)
        s = jnp.sum(y, axis=0, keepdims=True)
        q = jnp.sum(y * y, axis=0, keepdims=True)
        # broadcast to the 8-sublane output block (keeps the block shape (8,128)-legal
        # while leaving the M grid axis "parallel"); row 0 is read back on the host side.
        sum_ref[...] = jnp.broadcast_to(s, sum_ref.shape)
        ssq_ref[...] = jnp.broadcast_to(q, ssq_ref.shape)


def _mm_bias_kernel(a_ref, b_ref, bias_ref, o_ref):
    """f32-output matmul accumulating directly in the resident output block; bias fused
    into the final-K epilogue."""
    @pl.when(pl.program_id(2) == 0)
    def _():
        o_ref[...] = jnp.zeros_like(o_ref)

    o_ref[...] += jnp.dot(a_ref[...], b_ref[...],
                          preferred_element_type=jnp.float32)

    @pl.when(pl.program_id(2) == pl.num_programs(2) - 1)
    def _():
        o_ref[...] += bias_ref[...]


def pallas_matmul(a, b, bias=None, out_dtype=jnp.bfloat16, collect_stats=False):
    """(M, K) @ (K, N) [+ bias] with bf16 MXU operands and f32 accumulation.

    collect_stats=True also returns per-column sum / sum-of-squares of the f32 result
    (used to fuse the BatchNorm statistics pass into the producing convolution)."""
    M, K = a.shape
    K2, N = b.shape
    assert K == K2
    assert not (collect_stats and bias is not None)

    ab = a.astype(jnp.bfloat16)
    bb = b.astype(jnp.bfloat16)

    # N: collapse the N grid axis whenever the (padded) N fits one tile, so the big
    # A (im2col) operand is streamed exactly once and B stays resident.
    Np = N if N < 128 else _round_up(N, 128)
    if Np <= 512:
        tn = Np
    else:
        tn = 512 if Np % 512 == 0 else (256 if Np % 256 == 0 else 128)

    # K: single whole-K step when it fits comfortably in VMEM, otherwise large K tiles.
    if K <= 2048:
        Kp, tk = K, K
    else:
        Kp = _round_up(K, 128)
        tk = next(t for t in (512, 384, 256, 128) if Kp % t == 0)

    Mp = _round_up(M, 8)
    tm = _pick_tile(Mp, 512)

    ap = _pad2d_to(ab, Mp, Kp)
    bp = _pad2d_to(bb, Kp, Np)

    gm, gn, gk = Mp // tm, Np // tn, Kp // tk
    grid = (gm, gn, gk)

    in_specs = [pl.BlockSpec((tm, tk), lambda i, j, k: (i, k)),
                pl.BlockSpec((tk, tn), lambda i, j, k: (k, j))]
    args = [ap, bp]

    cost = pl.CostEstimate(
        flops=2 * Mp * Np * Kp,
        transcendentals=0,
        bytes_accessed=ap.size * 2 + bp.size * 2
        + Mp * Np * jnp.dtype(out_dtype).itemsize,
    )

    if collect_stats:
        kernel = _mm_stats_kernel
        out_shape = (jax.ShapeDtypeStruct((Mp, Np), out_dtype),
                     jax.ShapeDtypeStruct((8 * gm, Np), jnp.float32),
                     jax.ShapeDtypeStruct((8 * gm, Np), jnp.float32))
        out_specs = (pl.BlockSpec((tm, tn), lambda i, j, k: (i, j)),
                     pl.BlockSpec((8, tn), lambda i, j, k: (i, j)),
                     pl.BlockSpec((8, tn), lambda i, j, k: (i, j)))
        scratch = [pltpu.VMEM((tm, tn), jnp.float32)]
    elif bias is not None:
        out_dtype = jnp.float32
        kernel = _mm_bias_kernel
        bias_p = jnp.zeros((1, Np), jnp.float32).at[0, :N].set(bias.astype(jnp.float32))
        in_specs.append(pl.BlockSpec((1, tn), lambda i, j, k: (0, j)))
        args.append(bias_p)
        out_shape = jax.ShapeDtypeStruct((Mp, Np), jnp.float32)
        out_specs = pl.BlockSpec((tm, tn), lambda i, j, k: (i, j))
        scratch = []          # accumulate directly in the resident f32 output block
    else:
        kernel = _mm_kernel
        out_shape = jax.ShapeDtypeStruct((Mp, Np), out_dtype)
        out_specs = pl.BlockSpec((tm, tn), lambda i, j, k: (i, j))
        scratch = [pltpu.VMEM((tm, tn), jnp.float32)]

    res = pl.pallas_call(
        kernel,
        out_shape=out_shape,
        grid_spec=pltpu.PrefetchScalarGridSpec(
            num_scalar_prefetch=0,
            grid=grid,
            in_specs=in_specs,
            out_specs=out_specs,
            scratch_shapes=scratch,
        ),
        compiler_params=pltpu.CompilerParams(
            dimension_semantics=("parallel", "parallel", "arbitrary"),
            vmem_limit_bytes=_VMEM_LIMIT,
        ),
        cost_estimate=cost,
    )(*args)

    if collect_stats:
        out, psum, pssq = res
        ssum = jnp.sum(psum.reshape(gm, 8, Np)[:, 0, :], axis=0)[:N]
        ssq = jnp.sum(pssq.reshape(gm, 8, Np)[:, 0, :], axis=0)[:N]
        if (Mp, Np) != (M, N):
            out = out[:M, :N]
        return out, ssum, ssq

    out = res
    if (Mp, Np) != (M, N):
        out = out[:M, :N]
    return out


# ----------------------------------------------------------------------------
# Convolution = im2col (bf16 patches, K pre-padded to x128) + Pallas matmul w/ fused BN stats
# ----------------------------------------------------------------------------
def conv2d_bn_stats(x, w, stride, padding):
    """x: (N,H,W,Cin) NHWC bf16 ; w: (Cout,Cin,kh,kw) torch OIHW ; no bias.
    Returns (flat (M, Cout) bf16 output, (Cout,) sum, (Cout,) sumsq, (Ho, Wo))."""
    N, H, W, Cin = x.shape
    Cout, _, kh, kw = w.shape
    xb = x.astype(jnp.bfloat16)
    if padding > 0:
        xb = jnp.pad(xb, ((0, 0), (padding, padding), (padding, padding), (0, 0)))
    Ho = (H + 2 * padding - kh) // stride + 1
    Wo = (W + 2 * padding - kw) // stride + 1

    cols = [xb[:, i:i + stride * (Ho - 1) + 1:stride,
               j:j + stride * (Wo - 1) + 1:stride, :]
            for i in range(kh) for j in range(kw)]
    K = kh * kw * Cin
    Kp = _round_up(K, 128)
    if Kp != K:
        # zero-pad the contraction dim while the patch matrix is being built (no extra pass)
        cols.append(jnp.zeros((N, Ho, Wo, Kp - K), jnp.bfloat16))
    patches = cols[0] if len(cols) == 1 else jnp.concatenate(cols, axis=-1)
    patches = patches.reshape(N * Ho * Wo, Kp)

    wmat = jnp.transpose(w, (2, 3, 1, 0)).reshape(K, Cout)
    if Kp != K:
        wmat = jnp.pad(wmat, ((0, Kp - K), (0, 0)))
    out, ssum, ssq = pallas_matmul(patches, wmat.astype(jnp.bfloat16),
                                   out_dtype=jnp.bfloat16, collect_stats=True)
    return out, ssum, ssq, (Ho, Wo)


# ----------------------------------------------------------------------------
# BatchNorm (batch statistics): stats come fused from the producing matmul;
# this is the single tiled apply pass (+ optional residual w/ its own BN + optional ReLU).
# ----------------------------------------------------------------------------
def _bn_coeffs(ssum, ssq, count, gamma, beta, eps=1e-5):
    mean = ssum / count
    var = jnp.maximum(ssq / count - mean * mean, 0.0)   # biased variance (torch train mode)
    scale = gamma * jax.lax.rsqrt(var + eps)
    shift = beta - mean * scale
    return scale, shift


def _bn_apply_kernel_factory(apply_relu, has_res, has_res_bn):
    def kernel(*refs):
        if has_res and has_res_bn:
            x_ref, sc_ref, sh_ref, r_ref, rsc_ref, rsh_ref, o_ref = refs
        elif has_res:
            x_ref, sc_ref, sh_ref, r_ref, o_ref = refs
        else:
            x_ref, sc_ref, sh_ref, o_ref = refs
        y = x_ref[...].astype(jnp.float32) * sc_ref[...] + sh_ref[...]
        if has_res:
            r = r_ref[...].astype(jnp.float32)
            if has_res_bn:
                r = r * rsc_ref[...] + rsh_ref[...]
            y = y + r
        if apply_relu:
            y = jnp.maximum(y, 0.0)
        o_ref[...] = y.astype(o_ref.dtype)
    return kernel


def bn_apply(x_flat, scale, shift, residual=None, res_scale=None, res_shift=None,
             relu=True, out_dtype=jnp.bfloat16):
    """x_flat: (M, C) bf16.  out = relu(x*scale+shift [+ residual(*rs+rsh)]), bf16."""
    M, C = x_flat.shape

    # lane folding: present a 128-wide (lane-dense) last dim when C < 128
    fold = 1
    if C < 128 and 128 % C == 0 and M % (128 // C) == 0:
        fold = 128 // C
    Mf, Cf = M // fold, C * fold

    def lanevec(v):
        v = v.reshape(1, C).astype(jnp.float32)
        return jnp.tile(v, (1, fold)) if fold > 1 else v

    Mp = _round_up(Mf, 8)
    x2 = _pad_rows(x_flat.reshape(Mf, Cf), Mp)
    tm = _pick_tile(Mp, 2048)
    grid = (Mp // tm,)

    row_spec = pl.BlockSpec((tm, Cf), lambda i: (i, 0))
    vec_spec = pl.BlockSpec((1, Cf), lambda i: (0, 0))
    args = [x2, lanevec(scale), lanevec(shift)]
    in_specs = [row_spec, vec_spec, vec_spec]

    has_res = residual is not None
    has_res_bn = res_scale is not None
    if has_res:
        args.append(_pad_rows(residual.reshape(Mf, Cf), Mp))
        in_specs.append(row_spec)
        if has_res_bn:
            args += [lanevec(res_scale), lanevec(res_shift)]
            in_specs += [vec_spec, vec_spec]

    out = pl.pallas_call(
        _bn_apply_kernel_factory(relu, has_res, has_res_bn),
        out_shape=jax.ShapeDtypeStruct((Mp, Cf), out_dtype),
        grid_spec=pltpu.PrefetchScalarGridSpec(
            num_scalar_prefetch=0,
            grid=grid,
            in_specs=in_specs,
            out_specs=row_spec,
        ),
        compiler_params=pltpu.CompilerParams(
            dimension_semantics=("parallel",),
            vmem_limit_bytes=_VMEM_LIMIT,
        ),
    )(*args)
    if Mp != Mf:
        out = out[:Mf]
    return out.reshape(M, C)


# ----------------------------------------------------------------------------
# MaxPool 3x3 / stride 2 / pad 1  (9 shifted bf16 windows -> tiled, lane-folded max kernel)
# ----------------------------------------------------------------------------
def _max9_kernel(*refs):
    *in_refs, o_ref = refs
    m = in_refs[0][...]
    for r in in_refs[1:]:
        m = jnp.maximum(m, r[...])
    o_ref[...] = m


def maxpool_3x3_s2_p1(x):
    N, H, W, C = x.shape
    Ho = (H + 2 - 3) // 2 + 1
    Wo = (W + 2 - 3) // 2 + 1
    neg = float(jnp.finfo(x.dtype).min)
    xp = jnp.pad(x, ((0, 0), (1, 1), (1, 1), (0, 0)), constant_values=neg)

    M = N * Ho * Wo
    fold = 1
    if C < 128 and 128 % C == 0 and M % (128 // C) == 0:
        fold = 128 // C
    Mf, Cf = M // fold, C * fold

    wins = [xp[:, i:i + 2 * (Ho - 1) + 1:2,
               j:j + 2 * (Wo - 1) + 1:2, :].reshape(Mf, Cf)
            for i in range(3) for j in range(3)]
    Mp = _round_up(Mf, 8)
    if Mp != Mf:
        wins = [_pad_rows(w_, Mp) for w_ in wins]
    tm = _pick_tile(Mp, 2048)

    spec = pl.BlockSpec((tm, Cf), lambda i: (i, 0))
    out = pl.pallas_call(
        _max9_kernel,
        out_shape=jax.ShapeDtypeStruct((Mp, Cf), x.dtype),
        grid_spec=pltpu.PrefetchScalarGridSpec(
            num_scalar_prefetch=0,
            grid=(Mp // tm,),
            in_specs=[spec] * 9,
            out_specs=spec,
        ),
        compiler_params=pltpu.CompilerParams(
            dimension_semantics=("parallel",),
            vmem_limit_bytes=_VMEM_LIMIT,
        ),
    )(*wins)
    if Mp != Mf:
        out = out[:Mf]
    return out.reshape(N, Ho, Wo, C)


# ----------------------------------------------------------------------------
# Global average pool (AdaptiveAvgPool2d((1,1))) — tiled spatial reduction, f32 accumulator
# ----------------------------------------------------------------------------
def global_avgpool(x):
    N, H, W, C = x.shape
    HW = H * W
    x3 = x.reshape(N, HW, C)
    thw = _pick_tile(HW, 2048)
    inv = 1.0 / float(HW)

    def kernel(x_ref, o_ref):
        @pl.when(pl.program_id(0) == 0)
        def _():
            o_ref[...] = jnp.zeros_like(o_ref)
        o_ref[...] += jnp.sum(x_ref[...].astype(jnp.float32), axis=1) * inv

    return pl.pallas_call(
        kernel,
        out_shape=jax.ShapeDtypeStruct((N, C), jnp.float32),
        grid_spec=pltpu.PrefetchScalarGridSpec(
            num_scalar_prefetch=0,
            grid=(HW // thw,),
            in_specs=[pl.BlockSpec((N, thw, C), lambda i: (0, i, 0))],
            out_specs=pl.BlockSpec((N, C), lambda i: (0, 0)),
        ),
        compiler_params=pltpu.CompilerParams(
            dimension_semantics=("arbitrary",),
            vmem_limit_bytes=_VMEM_LIMIT,
        ),
    )(x3)


# ----------------------------------------------------------------------------
# Parameter init (deterministic, mirrors the torch __init__ shapes)
# ----------------------------------------------------------------------------
def _kaiming_conv(key, cout, cin, kh, kw):
    fan_out = cout * kh * kw
    std = math.sqrt(2.0 / fan_out)
    return std * jax.random.normal(key, (cout, cin, kh, kw), jnp.float32)


def init_resnet_params(key, layers=(1, 1, 1, 1), num_classes=10):
    keys = iter(jax.random.split(key, 128))
    params = {}
    params["conv1"] = _kaiming_conv(next(keys), 64, 3, 7, 7)
    params["bn1"] = (jnp.ones(64, jnp.float32), jnp.zeros(64, jnp.float32))

    inplanes = 64
    stages = []
    for planes, nblocks, stride in zip((64, 128, 256, 512), layers, (1, 2, 2, 2)):
        blocks = []
        for b in range(nblocks):
            s = stride if b == 0 else 1
            blk = {
                "stride": s,
                "conv1": _kaiming_conv(next(keys), planes, inplanes, 3, 3),
                "bn1": (jnp.ones(planes, jnp.float32), jnp.zeros(planes, jnp.float32)),
                "conv2": _kaiming_conv(next(keys), planes, planes, 3, 3),
                "bn2": (jnp.ones(planes, jnp.float32), jnp.zeros(planes, jnp.float32)),
            }
            if s != 1 or inplanes != planes:   # BasicBlock.expansion == 1
                blk["downsample"] = (
                    _kaiming_conv(next(keys), planes, inplanes, 1, 1),
                    jnp.ones(planes, jnp.float32),
                    jnp.zeros(planes, jnp.float32),
                )
            else:
                blk["downsample"] = None
            inplanes = planes
            blocks.append(blk)
        stages.append(blocks)
    params["stages"] = stages

    bound = 1.0 / math.sqrt(512)
    params["fc_w"] = jax.random.uniform(next(keys), (512, num_classes),
                                        jnp.float32, -bound, bound)
    params["fc_b"] = jax.random.uniform(next(keys), (num_classes,),
                                        jnp.float32, -bound, bound)
    return params


# ----------------------------------------------------------------------------
# Forward pass
# ----------------------------------------------------------------------------
def basic_block_forward(x, blk):
    N, H, W, Cin = x.shape
    planes = blk["conv1"].shape[0]
    s = blk["stride"]

    o1, s1, q1, (Ho, Wo) = conv2d_bn_stats(x, blk["conv1"], s, 1)
    cnt = N * Ho * Wo
    sc1, sh1 = _bn_coeffs(s1, q1, cnt, *blk["bn1"])
    h1 = bn_apply(o1, sc1, sh1, relu=True).reshape(N, Ho, Wo, planes)

    o2, s2, q2, _ = conv2d_bn_stats(h1, blk["conv2"], 1, 1)
    sc2, sh2 = _bn_coeffs(s2, q2, cnt, *blk["bn2"])

    if blk["downsample"] is not None:
        dw, dg, db = blk["downsample"]
        od, sd, qd, _ = conv2d_bn_stats(x, dw, s, 0)
        scd, shd = _bn_coeffs(sd, qd, cnt, dg, db)
        # bn2 + downsample-BN + residual add + relu fused in one tiled Pallas kernel
        y = bn_apply(o2, sc2, sh2, residual=od, res_scale=scd, res_shift=shd, relu=True)
    else:
        identity = x.reshape(cnt, Cin)
        y = bn_apply(o2, sc2, sh2, residual=identity, relu=True)
    return y.reshape(N, Ho, Wo, planes)


def resnet_forward(params, x_nchw):
    # layout: input is NCHW (torch convention); compute internally in NHWC, bf16 activations.
    x = jnp.transpose(x_nchw, (0, 2, 3, 1)).astype(jnp.bfloat16)
    N = x.shape[0]

    o, s, q, (Ho, Wo) = conv2d_bn_stats(x, params["conv1"], 2, 3)
    sc, sh = _bn_coeffs(s, q, N * Ho * Wo, *params["bn1"])
    x = bn_apply(o, sc, sh, relu=True).reshape(N, Ho, Wo, 64)
    x = maxpool_3x3_s2_p1(x)

    for stage in params["stages"]:
        for blk in stage:
            x = basic_block_forward(x, blk)

    pooled = global_avgpool(x)                                           # (N, 512) f32
    logits = pallas_matmul(pooled, params["fc_w"], bias=params["fc_b"],
                           out_dtype=jnp.float32)                        # bias fused epilogue
    return logits


# ----------------------------------------------------------------------------
if __name__ == "__main__":
    key = jax.random.PRNGKey(0)
    kp, kx = jax.random.split(key)
    params = init_resnet_params(kp, layers=(1, 1, 1, 1), num_classes=10)

    # Small but structurally valid input: batch=2, channels=3 (fixed by conv1), 32x32 spatial.
    x = jax.random.normal(kx, (2, 3, 32, 32), jnp.float32)

    logits = resnet_forward(params, x)
    jax.block_until_ready(logits)
    assert logits.shape == (2, 10)
    assert bool(jnp.all(jnp.isfinite(logits)))
    print("KERNEL_OK")
</pallas_src>

<mosaic_0001>
module attributes {stable_mosaic.version = 11 : i64} {
  func.func @_mm_stats_kernel(%arg0: i32, %arg1: i32, %arg2: i32, %arg3: memref<512x256xbf16, #tpu.memory_space<vmem>>, %arg4: memref<256x64xbf16, #tpu.memory_space<vmem>>, %arg5: memref<512x64xbf16, #tpu.memory_space<vmem>>, %arg6: memref<8x64xf32, #tpu.memory_space<vmem>>, %arg7: memref<8x64xf32, #tpu.memory_space<vmem>>, %arg8: memref<512x64xf32, #tpu.memory_space<vmem>>) attributes {dimension_semantics = [#tpu.dimension_semantics<parallel>, #tpu.dimension_semantics<parallel>, #tpu.dimension_semantics<arbitrary>], iteration_bounds = array<i64: 1, 1, 1>, scalar_prefetch = 0 : i64, scratch_operands = 1 : i64, tpu.core_type = #tpu.core_type<tc>, window_params = [{transform_indices = @transform_0, window_bounds = array<i64: 512, 256>}, {transform_indices = @transform_1, window_bounds = array<i64: 256, 64>}, {transform_indices = @transform_2, window_bounds = array<i64: 512, 64>}, {transform_indices = @transform_3, window_bounds = array<i64: 8, 64>}, {transform_indices = @transform_4, window_bounds = array<i64: 8, 64>}]} {
    %c0_i32 = arith.constant 0 : i32
    %0 = arith.cmpi eq, %arg2, %c0_i32 : i32
    %1 = arith.extui %0 : i1 to i32
    %c0_i32_0 = arith.constant 0 : i32
    %2 = arith.cmpi ne, %1, %c0_i32_0 : i32
    scf.if %2 {
      %cst_10 = arith.constant 0.000000e+00 : f32
      %12 = vector.broadcast %cst_10 : f32 to vector<512x64xf32>
      %c0_11 = arith.constant 0 : index
      %c0_12 = arith.constant 0 : index
      %13 = vector.load %arg8[%c0_11, %c0_12] : memref<512x64xf32, #tpu.memory_space<vmem>>, vector<512x64xf32>
      tpu.vector_store %arg8[%c0_11, %c0_12], %12 {strides = array<i32>} : memref<512x64xf32, #tpu.memory_space<vmem>>, vector<512x64xf32>,
    } else {
    }
    %c0 = arith.constant 0 : index
    %c0_1 = arith.constant 0 : index
    %3 = vector.load %arg8[%c0, %c0_1] : memref<512x64xf32, #tpu.memory_space<vmem>>, vector<512x64xf32>
    %c0_2 = arith.constant 0 : index
    %c0_3 = arith.constant 0 : index
    %4 = vector.load %arg3[%c0_2, %c0_3] : memref<512x256xbf16, #tpu.memory_space<vmem>>, vector<512x256xbf16>
    %c0_4 = arith.constant 0 : index
    %c0_5 = arith.constant 0 : index
    %5 = vector.load %arg4[%c0_4, %c0_5] : memref<256x64xbf16, #tpu.memory_space<vmem>>, vector<256x64xbf16>
    %cst = arith.constant dense<0.000000e+00> : vector<512x64xf32>
    %6 = tpu.matmul %4, %5, %cst {dimension_numbers = #tpu.dot_dimension_numbers<[1], [0], [0], [1], [0, 0, 1, 1], [], []>} : vector<512x256xbf16>, vector<256x64xbf16>, vector<512x64xf32> -> vector<512x64xf32>
    %7 = arith.addf %3, %6 : vector<512x64xf32>
    %c0_6 = arith.constant 0 : index
    %c0_7 = arith.constant 0 : index
    %8 = vector.load %arg8[%c0_6, %c0_7] : memref<512x64xf32, #tpu.memory_space<vmem>>, vector<512x64xf32>
    tpu.vector_store %arg8[%c0_6, %c0_7], %7 {strides = array<i32>} : memref<512x64xf32, #tpu.memory_space<vmem>>, vector<512x64xf32>,
    %c0_i32_8 = arith.constant 0 : i32
    %9 = arith.cmpi eq, %arg2, %c0_i32_8 : i32
    %10 = arith.extui %9 : i1 to i32
    %c0_i32_9 = arith.constant 0 : i32
    %11 = arith.cmpi ne, %10, %c0_i32_9 : i32
    scf.if %11 {
      %c0_10 = arith.constant 0 : index
      %c0_11 = arith.constant 0 : index
      %12 = vector.load %arg8[%c0_10, %c0_11] : memref<512x64xf32, #tpu.memory_space<vmem>>, vector<512x64xf32>
      %13 = arith.truncf %12 : vector<512x64xf32> to vector<512x64xbf16>
      %c0_12 = arith.constant 0 : index
      %c0_13 = arith.constant 0 : index
      %14 = vector.load %arg5[%c0_12, %c0_13] : memref<512x64xbf16, #tpu.memory_space<vmem>>, vector<512x64xbf16>
      tpu.vector_store %arg5[%c0_12, %c0_13], %13 {strides = array<i32>} : memref<512x64xbf16, #tpu.memory_space<vmem>>, vector<512x64xbf16>,
      %cst_14 = arith.constant dense<0.000000e+00> : vector<64xf32>
      %15 = vector.multi_reduction <add>, %12, %cst_14 [0] : vector<512x64xf32> to vector<64xf32>
      %16 = vector.shape_cast %15 : vector<64xf32> to vector<1x64xf32>
      %17 = arith.mulf %12, %12 : vector<512x64xf32>
      %cst_15 = arith.constant dense<0.000000e+00> : vector<64xf32>
      %18 = vector.multi_reduction <add>, %17, %cst_15 [0] : vector<512x64xf32> to vector<64xf32>
      %19 = vector.shape_cast %18 : vector<64xf32> to vector<1x64xf32>
      %20 = vector.shape_cast %16 : vector<1x64xf32> to vector<1x64xf32>
      %21 = vector.broadcast %20 : vector<1x64xf32> to vector<8x64xf32>
      %c0_16 = arith.constant 0 : index
      %c0_17 = arith.constant 0 : index
      %22 = vector.load %arg6[%c0_16, %c0_17] : memref<8x64xf32, #tpu.memory_space<vmem>>, vector<8x64xf32>
      tpu.vector_store %arg6[%c0_16, %c0_17], %21 {strides = array<i32>} : memref<8x64xf32, #tpu.memory_space<vmem>>, vector<8x64xf32>,
      %23 = vector.shape_cast %19 : vector<1x64xf32> to vector<1x64xf32>
      %24 = vector.broadcast %23 : vector<1x64xf32> to vector<8x64xf32>
      %c0_18 = arith.constant 0 : index
      %c0_19 = arith.constant 0 : index
      %25 = vector.load %arg7[%c0_18, %c0_19] : memref<8x64xf32, #tpu.memory_space<vmem>>, vector<8x64xf32>
      tpu.vector_store %arg7[%c0_18, %c0_19], %24 {strides = array<i32>} : memref<8x64xf32, #tpu.memory_space<vmem>>, vector<8x64xf32>,
    } else {
    }
    return
  }
  func.func @transform_0(%arg0: i32, %arg1: i32, %arg2: i32) -> (i32, i32) {
    %c0_i32 = arith.constant 0 : i32
    return %arg0, %arg2 : i32, i32
  }
  func.func @transform_1(%arg0: i32, %arg1: i32, %arg2: i32) -> (i32, i32) {
    %c0_i32 = arith.constant 0 : i32
    return %arg2, %arg1 : i32, i32
  }
  func.func @transform_2(%arg0: i32, %arg1: i32, %arg2: i32) -> (i32, i32) {
    %c0_i32 = arith.constant 0 : i32
    return %arg0, %arg1 : i32, i32
  }
  func.func @transform_3(%arg0: i32, %arg1: i32, %arg2: i32) -> (i32, i32) {
    %c0_i32 = arith.constant 0 : i32
    return %arg0, %arg1 : i32, i32
  }
  func.func @transform_4(%arg0: i32, %arg1: i32, %arg2: i32) -> (i32, i32) {
    %c0_i32 = arith.constant 0 : i32
    return %arg0, %arg1 : i32, i32
  }
}

</mosaic_0001>

<llo_original>
// kernel: tpu_custom_call.1
$region0: #{tpu_custom_call.1}
  #allocation0 [shape = 'u32[]', space=smem, size = 0x4, offset = 0x4, fixed_abs, tag = 'smem constant byte address 0x4 - core index']
  #allocation1 [shape = 'u32[144,128]{1,0:T(1,128)}', space=vmem, size = 0x12000, scoped, tag = 'internal scratch']
  #allocation2 [shape = 'f32[512,64]{1,0:T(8,128)}', space=vmem, size = 0x40000, scoped, tag = 'scratch operand']
  %s0 = inlined_call_operand.hbm [shape: bf16[512,256], index: 0, kind: input, shape index: {}]
  %s1 = inlined_call_operand.vmem [shape: bf16[256,64], index: 1, kind: input, shape index: {}]
  %s2 = inlined_call_operand.vmem [shape: bf16[512,64], index: 2, kind: output, shape index: {0}]
  %s3 = inlined_call_operand.hbm [shape: f32[8,64], index: 3, kind: output, shape index: {1}]
  %s4 = inlined_call_operand.hbm [shape: f32[8,64], index: 4, kind: output, shape index: {2}]
  %5 = xla_tuple %s2, %s3, %s4
  %s6 = sld [smem:[#allocation0]]
  $region46: #{tpu_custom_call.1} parent=0
    _
  %s8 = ssub.s32 1, %s6
  %s9 = scalar_select 0, %s8, %s6
  $region1: #{tpu_custom_call.1} parent=0
    #allocation3 [shape = 'u8[262144]{0}', space=vmem, size = 0x40000, scoped, tag = 'input window, operand 0, single buffered']
    #allocation4 [shape = 's32[1]{0}', space=sflag, size = 0x4, scoped, tag = 'scoped memory for tpu_custom_call.1']
    #allocation5 [shape = 's32[1]{0}', space=sflag, size = 0x4, scoped, tag = 'scoped memory for tpu_custom_call.1']
    #allocation6 [shape = 'u8[4096]{0}', space=vmem, size = 0x1000, scoped, tag = 'output window, operand 1, single buffered']
    #allocation7 [shape = 'u8[4096]{0}', space=vmem, size = 0x1000, scoped, tag = 'output window, operand 2, single buffered']
    #allocation8 [shape = 's32[1]{0}', space=sflag, size = 0x4, scoped, tag = 'scoped memory for tpu_custom_call.1']
    %10 = vsyncpa [#allocation4], 0
    %11 = vsyncpa [#allocation5], 0
    %12 = vsyncpa [#allocation8], 0
    // Predicated region
    $region2: #{tpu_custom_call.1} parent=1 // pred_check
      _
    $region3: #{tpu_custom_call.1} parent=1 // pred_check_branch
      %14 = sbr.rel (0) target = $region5
    $region4: #{tpu_custom_call.1} parent=1 // pred_region
      %s16 = ssub.s32 8192, 8192
      %17 = vsyncadd [#allocation4], %s16
      %s18 = sshll.u32 [#allocation3], 4
      %s19 = int_to_ptr.vmem [resolvable:$true] %s18
      %24 = dma.hbm_to_vmem [thread:$0]  %s0, 8192, %s19, [#allocation4], 128, 128, 8
    $region5: #{tpu_custom_call.1} parent=1 // pred_fallthru
      _
    // Predicated region
    $region6: #{tpu_custom_call.1} parent=1 // pred_check
      _
    $region7: #{tpu_custom_call.1} parent=1 // pred_check_branch
      %26 = sbr.rel (0) target = $region9
    $region8: #{tpu_custom_call.1} parent=1 // pred_region
      _
    $region9: #{tpu_custom_call.1} parent=1 // pred_fallthru
      _
    // Predicated region
    $region10: #{tpu_custom_call.1} parent=1 // pred_check
      _
    $region11: #{tpu_custom_call.1} parent=1 // pred_check_branch
      %28 = sbr.rel (0) target = $region13
    $region12: #{tpu_custom_call.1} parent=1 // pred_region
      %29 = dma.done [#allocation4], 8192
    $region13: #{tpu_custom_call.1} parent=1 // pred_fallthru
      _
    %p31 = scmp.eq.s32.totalorder 0, 0
    // Predicated region
    $region14: #{tpu_custom_call.1} parent=1 // pred_check
      %p32 = pneg %p31
    $region15: #{tpu_custom_call.1} parent=1 // pred_check_branch
      %34 = sbr.rel (%p32) target = $region17
    $region16: #{tpu_custom_call.1} parent=1 // pred_region
      %vm35 = vcmask 523264
      %36 = vst.msk [vmem:[#allocation2] sm:$0xff] %vm35, 0.0
      %37 = vst.msk [vmem:[#allocation2 + $0x8] sm:$0xff] %vm35, 0.0
      %38 = vst.msk [vmem:[#allocation2 + $0x10] sm:$0xff] %vm35, 0.0
      %39 = vst.msk [vmem:[#allocation2 + $0x18] sm:$0xff] %vm35, 0.0
      %40 = vst.msk [vmem:[#allocation2 + $0x20] sm:$0xff] %vm35, 0.0
      %41 = vst.msk [vmem:[#allocation2 + $0x28] sm:$0xff] %vm35, 0.0
      %42 = vst.msk [vmem:[#allocation2 + $0x30] sm:$0xff] %vm35, 0.0
      %43 = vst.msk [vmem:[#allocation2 + $0x38] sm:$0xff] %vm35, 0.0
      %44 = vst.msk [vmem:[#allocation2 + $0x40] sm:$0xff] %vm35, 0.0
      %45 = vst.msk [vmem:[#allocation2 + $0x48] sm:$0xff] %vm35, 0.0
      %46 = vst.msk [vmem:[#allocation2 + $0x50] sm:$0xff] %vm35, 0.0
      %47 = vst.msk [vmem:[#allocation2 + $0x58] sm:$0xff] %vm35, 0.0
      %48 = vst.msk [vmem:[#allocation2 + $0x60] sm:$0xff] %vm35, 0.0
      %49 = vst.msk [vmem:[#allocation2 + $0x68] sm:$0xff] %vm35, 0.0
      %50 = vst.msk [vmem:[#allocation2 + $0x70] sm:$0xff] %vm35, 0.0
      %51 = vst.msk [vmem:[#allocation2 + $0x78] sm:$0xff] %vm35, 0.0
      %52 = vst.msk [vmem:[#allocation2 + $0x80] sm:$0xff] %vm35, 0.0
      %53 = vst.msk [vmem:[#allocation2 + $0x88] sm:$0xff] %vm35, 0.0
      %54 = vst.msk [vmem:[#allocation2 + $0x90] sm:$0xff] %vm35, 0.0
      %55 = vst.msk [vmem:[#allocation2 + $0x98] sm:$0xff] %vm35, 0.0
      %56 = vst.msk [vmem:[#allocation2 + $0xa0] sm:$0xff] %vm35, 0.0
      %57 = vst.msk [vmem:[#allocation2 + $0xa8] sm:$0xff] %vm35, 0.0
      %58 = vst.msk [vmem:[#allocation2 + $0xb0] sm:$0xff] %vm35, 0.0
      %59 = vst.msk [vmem:[#allocation2 + $0xb8] sm:$0xff] %vm35, 0.0
      %60 = vst.msk [vmem:[#allocation2 + $0xc0] sm:$0xff] %vm35, 0.0
      %61 = vst.msk [vmem:[#allocation2 + $0xc8] sm:$0xff] %vm35, 0.0
      %62 = vst.msk [vmem:[#allocation2 + $0xd0] sm:$0xff] %vm35, 0.0
      %63 = vst.msk [vmem:[#allocation2 + $0xd8] sm:$0xff] %vm35, 0.0
      %64 = vst.msk [vmem:[#allocation2 + $0xe0] sm:$0xff] %vm35, 0.0
      %65 = vst.msk [vmem:[#allocation2 + $0xe8] sm:$0xff] %vm35, 0.0
      %66 = vst.msk [vmem:[#allocation2 + $0xf0] sm:$0xff] %vm35, 0.0
      %67 = vst.msk [vmem:[#allocation2 + $0xf8] sm:$0xff] %vm35, 0.0
      %68 = vst.msk [vmem:[#allocation2 + $0x100] sm:$0xff] %vm35, 0.0
      %69 = vst.msk [vmem:[#allocation2 + $0x108] sm:$0xff] %vm35, 0.0
      %70 = vst.msk [vmem:[#allocation2 + $0x110] sm:$0xff] %vm35, 0.0
      %71 = vst.msk [vmem:[#allocation2 + $0x118] sm:$0xff] %vm35, 0.0
      %72 = vst.msk [vmem:[#allocation2 + $0x120] sm:$0xff] %vm35, 0.0
      %73 = vst.msk [vmem:[#allocation2 + $0x128] sm:$0xff] %vm35, 0.0
      %74 = vst.msk [vmem:[#allocation2 + $0x130] sm:$0xff] %vm35, 0.0
      %75 = vst.msk [vmem:[#allocation2 + $0x138] sm:$0xff] %vm35, 0.0
      %76 = vst.msk [vmem:[#allocation2 + $0x140] sm:$0xff] %vm35, 0.0
      %77 = vst.msk [vmem:[#allocation2 + $0x148] sm:$0xff] %vm35, 0.0
      %78 = vst.msk [vmem:[#allocation2 + $0x150] sm:$0xff] %vm35, 0.0
      %79 = vst.msk [vmem:[#allocation2 + $0x158] sm:$0xff] %vm35, 0.0
      %80 = vst.msk [vmem:[#allocation2 + $0x160] sm:$0xff] %vm35, 0.0
      %81 = vst.msk [vmem:[#allocation2 + $0x168] sm:$0xff] %vm35, 0.0
      %82 = vst.msk [vmem:[#allocation2 + $0x170] sm:$0xff] %vm35, 0.0
      %83 = vst.msk [vmem:[#allocation2 + $0x178] sm:$0xff] %vm35, 0.0
      %84 = vst.msk [vmem:[#allocation2 + $0x180] sm:$0xff] %vm35, 0.0
      %85 = vst.msk [vmem:[#allocation2 + $0x188] sm:$0xff] %vm35, 0.0
      %86 = vst.msk [vmem:[#allocation2 + $0x190] sm:$0xff] %vm35, 0.0
      %87 = vst.msk [vmem:[#allocation2 + $0x198] sm:$0xff] %vm35, 0.0
      %88 = vst.msk [vmem:[#allocation2 + $0x1a0] sm:$0xff] %vm35, 0.0
      %89 = vst.msk [vmem:[#allocation2 + $0x1a8] sm:$0xff] %vm35, 0.0
      %90 = vst.msk [vmem:[#allocation2 + $0x1b0] sm:$0xff] %vm35, 0.0
      %91 = vst.msk [vmem:[#allocation2 + $0x1b8] sm:$0xff] %vm35, 0.0
      %92 = vst.msk [vmem:[#allocation2 + $0x1c0] sm:$0xff] %vm35, 0.0
      %93 = vst.msk [vmem:[#allocation2 + $0x1c8] sm:$0xff] %vm35, 0.0
      %94 = vst.msk [vmem:[#allocation2 + $0x1d0] sm:$0xff] %vm35, 0.0
      %95 = vst.msk [vmem:[#allocation2 + $0x1d8] sm:$0xff] %vm35, 0.0
      %96 = vst.msk [vmem:[#allocation2 + $0x1e0] sm:$0xff] %vm35, 0.0
      %97 = vst.msk [vmem:[#allocation2 + $0x1e8] sm:$0xff] %vm35, 0.0
      %98 = vst.msk [vmem:[#allocation2 + $0x1f0] sm:$0xff] %vm35, 0.0
      %99 = vst.msk [vmem:[#allocation2 + $0x1f8] sm:$0xff] %vm35, 0.0
    $region17: #{tpu_custom_call.1} parent=1 // pred_fallthru
      _
    %v100 = vld [vmem:[#allocation2] sm:$0xff]
    %v101 = vld [vmem:[#allocation2 + $0x8] sm:$0xff]
    %v102 = vld [vmem:[#allocation2 + $0x10] sm:$0xff]
    %v103 = vld [vmem:[#allocation2 + $0x18] sm:$0xff]
    %v104 = vld [vmem:[#allocation2 + $0x20] sm:$0xff]
    %v105 = vld [vmem:[#allocation2 + $0x28] sm:$0xff]
    %v106 = vld [vmem:[#allocation2 + $0x30] sm:$0xff]
    %v107 = vld [vmem:[#allocation2 + $0x38] sm:$0xff]
    %v108 = vld [vmem:[#allocation2 + $0x40] sm:$0xff]
    %v109 = vld [vmem:[#allocation2 + $0x48] sm:$0xff]
    %v110 = vld [vmem:[#allocation2 + $0x50] sm:$0xff]
    %v111 = vld [vmem:[#allocation2 + $0x58] sm:$0xff]
    %v112 = vld [vmem:[#allocation2 + $0x60] sm:$0xff]
    %v113 = vld [vmem:[#allocation2 + $0x68] sm:$0xff]
    %v114 = vld [vmem:[#allocation2 + $0x70] sm:$0xff]
    %v115 = vld [vmem:[#allocation2 + $0x78] sm:$0xff]
    %v116 = vld [vmem:[#allocation2 + $0x80] sm:$0xff]
    %v117 = vld [vmem:[#allocation2 + $0x88] sm:$0xff]
    %v118 = vld [vmem:[#allocation2 + $0x90] sm:$0xff]
    %v119 = vld [vmem:[#allocation2 + $0x98] sm:$0xff]
    %v120 = vld [vmem:[#allocation2 + $0xa0] sm:$0xff]
    %v121 = vld [vmem:[#allocation2 + $0xa8] sm:$0xff]
    %v122 = vld [vmem:[#allocation2 + $0xb0] sm:$0xff]
    %v123 = vld [vmem:[#allocation2 + $0xb8] sm:$0xff]
    %v124 = vld [vmem:[#allocation2 + $0xc0] sm:$0xff]
    %v125 = vld [vmem:[#allocation2 + $0xc8] sm:$0xff]
    %v126 = vld [vmem:[#allocation2 + $0xd0] sm:$0xff]
    %v127 = vld [vmem:[#allocation2 + $0xd8] sm:$0xff]
    %v128 = vld [vmem:[#allocation2 + $0xe0] sm:$0xff]
    %v129 = vld [vmem:[#allocation2 + $0xe8] sm:$0xff]
    %v130 = vld [vmem:[#allocation2 + $0xf0] sm:$0xff]
    %v131 = vld [vmem:[#allocation2 + $0xf8] sm:$0xff]
    %v132 = vld [vmem:[#allocation2 + $0x100] sm:$0xff]
    %v133 = vld [vmem:[#allocation2 + $0x108] sm:$0xff]
    %v134 = vld [vmem:[#allocation2 + $0x110] sm:$0xff]
    %v135 = vld [vmem:[#allocation2 + $0x118] sm:$0xff]
    %v136 = vld [vmem:[#allocation2 + $0x120] sm:$0xff]
    %v137 = vld [vmem:[#allocation2 + $0x128] sm:$0xff]
    %v138 = vld [vmem:[#allocation2 + $0x130] sm:$0xff]
    %v139 = vld [vmem:[#allocation2 + $0x138] sm:$0xff]
    %v140 = vld [vmem:[#allocation2 + $0x140] sm:$0xff]
    %v141 = vld [vmem:[#allocation2 + $0x148] sm:$0xff]
    %v142 = vld [vmem:[#allocation2 + $0x150] sm:$0xff]
    %v143 = vld [vmem:[#allocation2 + $0x158] sm:$0xff]
    %v144 = vld [vmem:[#allocation2 + $0x160] sm:$0xff]
    %v145 = vld [vmem:[#allocation2 + $0x168] sm:$0xff]
    %v146 = vld [vmem:[#allocation2 + $0x170] sm:$0xff]
    %v147 = vld [vmem:[#allocation2 + $0x178] sm:$0xff]
    %v148 = vld [vmem:[#allocation2 + $0x180] sm:$0xff]
    %v149 = vld [vmem:[#allocation2 + $0x188] sm:$0xff]
    %v150 = vld [vmem:[#allocation2 + $0x190] sm:$0xff]
    %v151 = vld [vmem:[#allocation2 + $0x198] sm:$0xff]
    %v152 = vld [vmem:[#allocation2 + $0x1a0] sm:$0xff]
    %v153 = vld [vmem:[#allocation2 + $0x1a8] sm:$0xff]
    %v154 = vld [vmem:[#allocation2 + $0x1b0] sm:$0xff]
    %v155 = vld [vmem:[#allocation2 + $0x1b8] sm:$0xff]
    %v156 = vld [vmem:[#allocation2 + $0x1c0] sm:$0xff]
    %v157 = vld [vmem:[#allocation2 + $0x1c8] sm:$0xff]
    %v158 = vld [vmem:[#allocation2 + $0x1d0] sm:$0xff]
    %v159 = vld [vmem:[#allocation2 + $0x1d8] sm:$0xff]
    %v160 = vld [vmem:[#allocation2 + $0x1e0] sm:$0xff]
    %v161 = vld [vmem:[#allocation2 + $0x1e8] sm:$0xff]
    %v162 = vld [vmem:[#allocation2 + $0x1f0] sm:$0xff]
    %v163 = vld [vmem:[#allocation2 + $0x1f8] sm:$0xff]
    %v164 = vld [vmem:[#allocation3] sm:$0xff]
    %v165 = vld [vmem:[#allocation3 + $0x8] sm:$0xff]
    %v166 = vld [vmem:[#allocation3 + $0x10] sm:$0xff]
    %v167 = vld [vmem:[#allocation3 + $0x18] sm:$0xff]
    %v168 = vld [vmem:[#allocation3 + $0x20] sm:$0xff]
    %v169 = vld [vmem:[#allocation3 + $0x28] sm:$0xff]
    %v170 = vld [vmem:[#allocation3 + $0x30] sm:$0xff]
    %v171 = vld [vmem:[#allocation3 + $0x38] sm:$0xff]
    %v172 = vld [vmem:[#allocation3 + $0x40] sm:$0xff]
    %v173 = vld [vmem:[#allocation3 + $0x48] sm:$0xff]
    %v174 = vld [vmem:[#allocation3 + $0x50] sm:$0xff]
    %v175 = vld [vmem:[#allocation3 + $0x58] sm:$0xff]
    %v176 = vld [vmem:[#allocation3 + $0x60] sm:$0xff]
    %v177 = vld [vmem:[#allocation3 + $0x68] sm:$0xff]
    %v178 = vld [vmem:[#allocation3 + $0x70] sm:$0xff]
    %v179 = vld [vmem:[#allocation3 + $0x78] sm:$0xff]
    %v180 = vld [vmem:[#allocation3 + $0x80] sm:$0xff]
    %v181 = vld [vmem:[#allocation3 + $0x88] sm:$0xff]
    %v182 = vld [vmem:[#allocation3 + $0x90] sm:$0xff]
    %v183 = vld [vmem:[#allocation3 + $0x98] sm:$0xff]
    %v184 = vld [vmem:[#allocation3 + $0xa0] sm:$0xff]
    %v185 = vld [vmem:[#allocation3 + $0xa8] sm:$0xff]
    %v186 = vld [vmem:[#allocation3 + $0xb0] sm:$0xff]
    %v187 = vld [vmem:[#allocation3 + $0xb8] sm:$0xff]
    %v188 = vld [vmem:[#allocation3 + $0xc0] sm:$0xff]
    %v189 = vld [vmem:[#allocation3 + $0xc8] sm:$0xff]
    %v190 = vld [vmem:[#allocation3 + $0xd0] sm:$0xff]
    %v191 = vld [vmem:[#allocation3 + $0xd8] sm:$0xff]
    %v192 = vld [vmem:[#allocation3 + $0xe0] sm:$0xff]
    %v193 = vld [vmem:[#allocation3 + $0xe8] sm:$0xff]
    %v194 = vld [vmem:[#allocation3 + $0xf0] sm:$0xff]
    %v195 = vld [vmem:[#allocation3 + $0xf8] sm:$0xff]
    %v196 = vld [vmem:[#allocation3 + $0x100] sm:$0xff]
    %v197 = vld [vmem:[#allocation3 + $0x108] sm:$0xff]
    %v198 = vld [vmem:[#allocation3 + $0x110] sm:$0xff]
    %v199 = vld [vmem:[#allocation3 + $0x118] sm:$0xff]
    %v200 = vld [vmem:[#allocation3 + $0x120] sm:$0xff]
    %v201 = vld [vmem:[#allocation3 + $0x128] sm:$0xff]
    %v202 = vld [vmem:[#allocation3 + $0x130] sm:$0xff]
    %v203 = vld [vmem:[#allocation3 + $0x138] sm:$0xff]
    %v204 = vld [vmem:[#allocation3 + $0x140] sm:$0xff]
    %v205 = vld [vmem:[#allocation3 + $0x148] sm:$0xff]
    %v206 = vld [vmem:[#allocation3 + $0x150] sm:$0xff]
    %v207 = vld [vmem:[#allocation3 + $0x158] sm:$0xff]
    %v208 = vld [vmem:[#allocation3 + $0x160] sm:$0xff]
    %v209 = vld [vmem:[#allocation3 + $0x168] sm:$0xff]
    %v210 = vld [vmem:[#allocation3 + $0x170] sm:$0xff]
    %v211 = vld [vmem:[#allocation3 + $0x178] sm:$0xff]
    %v212 = vld [vmem:[#allocation3 + $0x180] sm:$0xff]
    %v213 = vld [vmem:[#allocation3 + $0x188] sm:$0xff]
    %v214 = vld [vmem:[#allocation3 + $0x190] sm:$0xff]
    %v215 = vld [vmem:[#allocation3 + $0x198] sm:$0xff]
    %v216 = vld [vmem:[#allocation3 + $0x1a0] sm:$0xff]
    %v217 = vld [vmem:[#allocation3 + $0x1a8] sm:$0xff]
    %v218 = vld [vmem:[#allocation3 + $0x1b0] sm:$0xff]
    %v219 = vld [vmem:[#allocation3 + $0x1b8] sm:$0xff]
    %v220 = vld [vmem:[#allocation3 + $0x1c0] sm:$0xff]
    %v221 = vld [vmem:[#allocation3 + $0x1c8] sm:$0xff]
    %v222 = vld [vmem:[#allocation3 + $0x1d0] sm:$0xff]
    %v223 = vld [vmem:[#allocation3 + $0x1d8] sm:$0xff]
    %v224 = vld [vmem:[#allocation3 + $0x1e0] sm:$0xff]
    %v225 = vld [vmem:[#allocation3 + $0x1e8] sm:$0xff]
    %v226 = vld [vmem:[#allocation3 + $0x1f0] sm:$0xff]
    %v227 = vld [vmem:[#allocation3 + $0x1f8] sm:$0xff]
    %v228 = vld [vmem:[%s1] sm:$0xf]
    %v229 = vld [vmem:[%s1 + $0x4] sm:$0xf]
    %v230 = vld [vmem:[%s1 + $0x8] sm:$0xf]
    %v231 = vld [vmem:[%s1 + $0xc] sm:$0xf]
    %v232 = vld [vmem:[%s1 + $0x10] sm:$0xf]
    %v233 = vld [vmem:[%s1 + $0x14] sm:$0xf]
    %v234 = vld [vmem:[%s1 + $0x18] sm:$0xf]
    %v235 = vld [vmem:[%s1 + $0x1c] sm:$0xf]
    %v236 = vld [vmem:[%s1 + $0x20] sm:$0xf]
    %v237 = vld [vmem:[%s1 + $0x24] sm:$0xf]
    %v238 = vld [vmem:[%s1 + $0x28] sm:$0xf]
    %v239 = vld [vmem:[%s1 + $0x2c] sm:$0xf]
    %v240 = vld [vmem:[%s1 + $0x30] sm:$0xf]
    %v241 = vld [vmem:[%s1 + $0x34] sm:$0xf]
    %v242 = vld [vmem:[%s1 + $0x38] sm:$0xf]
    %v243 = vld [vmem:[%s1 + $0x3c] sm:$0xf]
    %v244 = vld [vmem:[%s1 + $0x40] sm:$0xf]
    %v245 = vld [vmem:[%s1 + $0x44] sm:$0xf]
    %v246 = vld [vmem:[%s1 + $0x48] sm:$0xf]
    %v247 = vld [vmem:[%s1 + $0x4c] sm:$0xf]
    %v248 = vld [vmem:[%s1 + $0x50] sm:$0xf]
    %v249 = vld [vmem:[%s1 + $0x54] sm:$0xf]
    %v250 = vld [vmem:[%s1 + $0x58] sm:$0xf]
    %v251 = vld [vmem:[%s1 + $0x5c] sm:$0xf]
    %v252 = vld [vmem:[%s1 + $0x60] sm:$0xf]
    %v253 = vld [vmem:[%s1 + $0x64] sm:$0xf]
    %v254 = vld [vmem:[%s1 + $0x68] sm:$0xf]
    %v255 = vld [vmem:[%s1 + $0x6c] sm:$0xf]
    %v256 = vld [vmem:[%s1 + $0x70] sm:$0xf]
    %v257 = vld [vmem:[%s1 + $0x74] sm:$0xf]
    %v258 = vld [vmem:[%s1 + $0x78] sm:$0xf]
    %v259 = vld [vmem:[%s1 + $0x7c] sm:$0xf]
    %v324 = vunpack.c.l.b16 %v164
    %v325 = vunpack.c.h.b16 %v164
    %v326 = vunpack.c.l.b16 %v165
    %v327 = vunpack.c.h.b16 %v165
    %v328 = vunpack.c.l.b16 %v166
    %v329 = vunpack.c.h.b16 %v166
    %v330 = vunpack.c.l.b16 %v167
    %v331 = vunpack.c.h.b16 %v167
    %v332 = vunpack.c.l.b16 %v168
    %v333 = vunpack.c.h.b16 %v168
    %v334 = vunpack.c.l.b16 %v169
    %v335 = vunpack.c.h.b16 %v169
    %v336 = vunpack.c.l.b16 %v170
    %v337 = vunpack.c.h.b16 %v170
    %v338 = vunpack.c.l.b16 %v171
    %v339 = vunpack.c.h.b16 %v171
    %v340 = vunpack.c.l.b16 %v172
    %v341 = vunpack.c.h.b16 %v172
    %v342 = vunpack.c.l.b16 %v173
    %v343 = vunpack.c.h.b16 %v173
    %v344 = vunpack.c.l.b16 %v174
    %v345 = vunpack.c.h.b16 %v174
    %v346 = vunpack.c.l.b16 %v175
    %v347 = vunpack.c.h.b16 %v175
    %v348 = vunpack.c.l.b16 %v176
    %v349 = vunpack.c.h.b16 %v176
    %v350 = vunpack.c.l.b16 %v177
    %v351 = vunpack.c.h.b16 %v177
    %v352 = vunpack.c.l.b16 %v178
    %v353 = vunpack.c.h.b16 %v178
    %v354 = vunpack.c.l.b16 %v179
    %v355 = vunpack.c.h.b16 %v179
    %v356 = vunpack.c.l.b16 %v180
    %v357 = vunpack.c.h.b16 %v180
    %v358 = vunpack.c.l.b16 %v181
    %v359 = vunpack.c.h.b16 %v181
    %v360 = vunpack.c.l.b16 %v182
    %v361 = vunpack.c.h.b16 %v182
    %v362 = vunpack.c.l.b16 %v183
    %v363 = vunpack.c.h.b16 %v183
    %v364 = vunpack.c.l.b16 %v184
    %v365 = vunpack.c.h.b16 %v184
    %v366 = vunpack.c.l.b16 %v185
    %v367 = vunpack.c.h.b16 %v185
    %v368 = vunpack.c.l.b16 %v186
    %v369 = vunpack.c.h.b16 %v186
    %v370 = vunpack.c.l.b16 %v187
    %v371 = vunpack.c.h.b16 %v187
    %v372 = vunpack.c.l.b16 %v188
    %v373 = vunpack.c.h.b16 %v188
    %v374 = vunpack.c.l.b16 %v189
    %v375 = vunpack.c.h.b16 %v189
    %v376 = vunpack.c.l.b16 %v190
    %v377 = vunpack.c.h.b16 %v190
    %v378 = vunpack.c.l.b16 %v191
    %v379 = vunpack.c.h.b16 %v191
    %v380 = vunpack.c.l.b16 %v192
    %v381 = vunpack.c.h.b16 %v192
    %v382 = vunpack.c.l.b16 %v193
    %v383 = vunpack.c.h.b16 %v193
    %v384 = vunpack.c.l.b16 %v194
    %v385 = vunpack.c.h.b16 %v194
    %v386 = vunpack.c.l.b16 %v195
    %v387 = vunpack.c.h.b16 %v195
    %v388 = vunpack.c.l.b16 %v196
    %v389 = vunpack.c.h.b16 %v196
    %v390 = vunpack.c.l.b16 %v197
    %v391 = vunpack.c.h.b16 %v197
    %v392 = vunpack.c.l.b16 %v198
    %v393 = vunpack.c.h.b16 %v198
    %v394 = vunpack.c.l.b16 %v199
    %v395 = vunpack.c.h.b16 %v199
    %v396 = vunpack.c.l.b16 %v200
    %v397 = vunpack.c.h.b16 %v200
    %v398 = vunpack.c.l.b16 %v201
    %v399 = vunpack.c.h.b16 %v201
    %v400 = vunpack.c.l.b16 %v202
    %v401 = vunpack.c.h.b16 %v202
    %v402 = vunpack.c.l.b16 %v203
    %v403 = vunpack.c.h.b16 %v203
    %v404 = vunpack.c.l.b16 %v204
    %v405 = vunpack.c.h.b16 %v204
    %v406 = vunpack.c.l.b16 %v205
    %v407 = vunpack.c.h.b16 %v205
    %v408 = vunpack.c.l.b16 %v206
    %v409 = vunpack.c.h.b16 %v206
    %v410 = vunpack.c.l.b16 %v207
    %v411 = vunpack.c.h.b16 %v207
    %v412 = vunpack.c.l.b16 %v208
    %v413 = vunpack.c.h.b16 %v208
    %v414 = vunpack.c.l.b16 %v209
    %v415 = vunpack.c.h.b16 %v209
    %v416 = vunpack.c.l.b16 %v210
    %v417 = vunpack.c.h.b16 %v210
    %v418 = vunpack.c.l.b16 %v211
    %v419 = vunpack.c.h.b16 %v211
    %v420 = vunpack.c.l.b16 %v212
    %v421 = vunpack.c.h.b16 %v212
    %v422 = vunpack.c.l.b16 %v213
    %v423 = vunpack.c.h.b16 %v213
    %v424 = vunpack.c.l.b16 %v214
    %v425 = vunpack.c.h.b16 %v214
    %v426 = vunpack.c.l.b16 %v215
    %v427 = vunpack.c.h.b16 %v215
    %v428 = vunpack.c.l.b16 %v216
    %v429 = vunpack.c.h.b16 %v216
    %v430 = vunpack.c.l.b16 %v217
    %v431 = vunpack.c.h.b16 %v217
    %v432 = vunpack.c.l.b16 %v218
    %v433 = vunpack.c.h.b16 %v218
    %v434 = vunpack.c.l.b16 %v219
    %v435 = vunpack.c.h.b16 %v219
    %v436 = vunpack.c.l.b16 %v220
    %v437 = vunpack.c.h.b16 %v220
    %v438 = vunpack.c.l.b16 %v221
    %v439 = vunpack.c.h.b16 %v221
    %v440 = vunpack.c.l.b16 %v222
    %v441 = vunpack.c.h.b16 %v222
    %v442 = vunpack.c.l.b16 %v223
    %v443 = vunpack.c.h.b16 %v223
    %v444 = vunpack.c.l.b16 %v224
    %v445 = vunpack.c.h.b16 %v224
    %v446 = vunpack.c.l.b16 %v225
    %v447 = vunpack.c.h.b16 %v225
    %v448 = vunpack.c.l.b16 %v226
    %v449 = vunpack.c.h.b16 %v226
    %v450 = vunpack.c.l.b16 %v227
    %v451 = vunpack.c.h.b16 %v227
    %v452 = vpack.c.b16 %v326, %v324
    %v453 = vpack.c.b16 %v327, %v325
    %v454 = vpack.c.b16 %v330, %v328
    %v455 = vpack.c.b16 %v331, %v329
    %v456 = vpack.c.b16 %v334, %v332
    %v457 = vpack.c.b16 %v335, %v333
    %v458 = vpack.c.b16 %v338, %v336
    %v459 = vpack.c.b16 %v339, %v337
    %v460 = vpack.c.b16 %v342, %v340
    %v461 = vpack.c.b16 %v343, %v341
    %v462 = vpack.c.b16 %v346, %v344
    %v463 = vpack.c.b16 %v347, %v345
    %v464 = vpack.c.b16 %v350, %v348
    %v465 = vpack.c.b16 %v351, %v349
    %v466 = vpack.c.b16 %v354, %v352
    %v467 = vpack.c.b16 %v355, %v353
    %v468 = vpack.c.b16 %v358, %v356
    %v469 = vpack.c.b16 %v359, %v357
    %v470 = vpack.c.b16 %v362, %v360
    %v471 = vpack.c.b16 %v363, %v361
    %v472 = vpack.c.b16 %v366, %v364
    %v473 = vpack.c.b16 %v367, %v365
    %v474 = vpack.c.b16 %v370, %v368
    %v475 = vpack.c.b16 %v371, %v369
    %v476 = vpack.c.b16 %v374, %v372
    %v477 = vpack.c.b16 %v375, %v373
    %v478 = vpack.c.b16 %v378, %v376
    %v479 = vpack.c.b16 %v379, %v377
    %v480 = vpack.c.b16 %v382, %v380
    %v481 = vpack.c.b16 %v383, %v381
    %v482 = vpack.c.b16 %v386, %v384
    %v483 = vpack.c.b16 %v387, %v385
    %v484 = vpack.c.b16 %v390, %v388
    %v485 = vpack.c.b16 %v391, %v389
    %v486 = vpack.c.b16 %v394, %v392
    %v487 = vpack.c.b16 %v395, %v393
    %v488 = vpack.c.b16 %v398, %v396
    %v489 = vpack.c.b16 %v399, %v397
    %v490 = vpack.c.b16 %v402, %v400
    %v491 = vpack.c.b16 %v403, %v401
    %v492 = vpack.c.b16 %v406, %v404
    %v493 = vpack.c.b16 %v407, %v405
    %v494 = vpack.c.b16 %v410, %v408
    %v495 = vpack.c.b16 %v411, %v409
    %v496 = vpack.c.b16 %v414, %v412
    %v497 = vpack.c.b16 %v415, %v413
    %v498 = vpack.c.b16 %v418, %v416
    %v499 = vpack.c.b16 %v419, %v417
    %v500 = vpack.c.b16 %v422, %v420
    %v501 = vpack.c.b16 %v423, %v421
    %v502 = vpack.c.b16 %v426, %v424
    %v503 = vpack.c.b16 %v427, %v425
    %v504 = vpack.c.b16 %v430, %v428
    %v505 = vpack.c.b16 %v431, %v429
    %v506 = vpack.c.b16 %v434, %v432
    %v507 = vpack.c.b16 %v435, %v433
    %v508 = vpack.c.b16 %v438, %v436
    %v509 = vpack.c.b16 %v439, %v437
    %v510 = vpack.c.b16 %v442, %v440
    %v511 = vpack.c.b16 %v443, %v441
    %v512 = vpack.c.b16 %v446, %v444
    %v513 = vpack.c.b16 %v447, %v445
    %v514 = vpack.c.b16 %v450, %v448
    %v515 = vpack.c.b16 %v451, %v449
    %v612 = vunpack.c.l.b16 %v228
    %v613 = vunpack.c.l.b16 %v229
    %v614 = vunpack.c.l.b16 %v230
    %v615 = vunpack.c.l.b16 %v231
    %v616 = vunpack.c.l.b16 %v232
    %v617 = vunpack.c.l.b16 %v233
    %v618 = vunpack.c.l.b16 %v234
    %v619 = vunpack.c.l.b16 %v235
    %v620 = vunpack.c.l.b16 %v236
    %v621 = vunpack.c.l.b16 %v237
    %v622 = vunpack.c.l.b16 %v238
    %v623 = vunpack.c.l.b16 %v239
    %v624 = vunpack.c.l.b16 %v240
    %v625 = vunpack.c.l.b16 %v241
    %v626 = vunpack.c.l.b16 %v242
    %v627 = vunpack.c.l.b16 %v243
    %v628 = vunpack.c.l.b16 %v244
    %v629 = vunpack.c.l.b16 %v245
    %v630 = vunpack.c.l.b16 %v246
    %v631 = vunpack.c.l.b16 %v247
    %v632 = vunpack.c.l.b16 %v248
    %v633 = vunpack.c.l.b16 %v249
    %v634 = vunpack.c.l.b16 %v250
    %v635 = vunpack.c.l.b16 %v251
    %v636 = vunpack.c.l.b16 %v252
    %v637 = vunpack.c.l.b16 %v253
    %v638 = vunpack.c.l.b16 %v254
    %v639 = vunpack.c.l.b16 %v255
    %v640 = vunpack.c.l.b16 %v256
    %v641 = vunpack.c.l.b16 %v257
    %v642 = vunpack.c.l.b16 %v258
    %v643 = vunpack.c.l.b16 %v259
    %v644 = vpack.c.b16 %v613, %v612
    %v645 = vpack.c.b16 %v615, %v614
    %v646 = vpack.c.b16 %v617, %v616
    %v647 = vpack.c.b16 %v619, %v618
    %v648 = vpack.c.b16 %v621, %v620
    %v649 = vpack.c.b16 %v623, %v622
    %v650 = vpack.c.b16 %v625, %v624
    %v651 = vpack.c.b16 %v627, %v626
    %v652 = vpack.c.b16 %v629, %v628
    %v653 = vpack.c.b16 %v631, %v630
    %v654 = vpack.c.b16 %v633, %v632
    %v655 = vpack.c.b16 %v635, %v634
    %v656 = vpack.c.b16 %v637, %v636
    %v657 = vpack.c.b16 %v639, %v638
    %v658 = vpack.c.b16 %v641, %v640
    %v659 = vpack.c.b16 %v643, %v642
    %676 = vmatprep.subr.bf16.mxu0 0
    %677 = vmatpush1.bf16.msra.mxu0 %v644
    %678 = vmatprep.subr.bf16.mxu0 0
    %679 = vmatpush1.bf16.msra.mxu0 %v645
    %680 = vmatprep.subr.bf16.mxu0 0
    %681 = vmatpush1.bf16.msra.mxu0 %v646
    %682 = vmatprep.subr.bf16.mxu0 0
    %683 = vmatpush1.bf16.msra.mxu0 %v647
    %684 = vmatprep.subr.bf16.mxu0 0
    %685 = vmatpush1.bf16.msra.mxu0 %v648
    %686 = vmatprep.subr.bf16.mxu0 0
    %687 = vmatpush1.bf16.msra.mxu0 %v649
    %688 = vmatprep.subr.bf16.mxu0 0
    %689 = vmatpush1.bf16.msra.mxu0 %v650
    %690 = vmatprep.subr.bf16.mxu0 0
    %691 = vmatpush1.bf16.msra.mxu0 %v651
    %692 = vmatprep.subr.bf16.mxu0 0
    %693 = vmatpush1.bf16.msra.mxu0 %v652
    %694 = vmatprep.subr.bf16.mxu0 0
    %695 = vmatpush1.bf16.msra.mxu0 %v653
    %696 = vmatprep.subr.bf16.mxu0 0
    %697 = vmatpush1.bf16.msra.mxu0 %v654
    %698 = vmatprep.subr.bf16.mxu0 0
    %699 = vmatpush1.bf16.msra.mxu0 %v655
    %700 = vmatprep.subr.bf16.mxu0 0
    %701 = vmatpush1.bf16.msra.mxu0 %v656
    %702 = vmatprep.subr.bf16.mxu0 0
    %703 = vmatpush1.bf16.msra.mxu0 %v657
    %704 = vmatprep.subr.bf16.mxu0 0
    %705 = vmatpush1.bf16.msra.mxu0 %v658
    %706 = vmatprep.subr.bf16.mxu0 0
    %707 = vmatpush1.bf16.msra.mxu0 %v659
    %708 = vmatprep.mubr.bf16.mxu0 %v453
    %709 = vmatmul.mubr.bf16.gmra.mrb[0].mxu0 %v452
    %v710 = vpop.f32.mrb[0].mxu0
    %v711 = vadd.f32 0.0, %v710
    %v712 = vpop.f32.mrb[0].mxu0
    %v713 = vpop.f32.mrb[0].mxu0
    %v714 = vadd.f32 0.0, %v713
    %v715 = vpop.f32.mrb[0].mxu0
    %716 = vmatprep.mubr.bf16.mxu0 %v455
    %717 = vmatmul.mubr.bf16.gmra.mrb[0].mxu0 %v454
    %v718 = vpop.f32.mrb[0].mxu0
    %v719 = vadd.f32 0.0, %v718
    %v720 = vpop.f32.mrb[0].mxu0
    %v721 = vpop.f32.mrb[0].mxu0
    %v722 = vadd.f32 0.0, %v721
    %v723 = vpop.f32.mrb[0].mxu0
    %724 = vmatprep.mubr.bf16.mxu0 %v457
    %725 = vmatmul.mubr.bf16.gmra.mrb[0].mxu0 %v456
    %v726 = vpop.f32.mrb[0].mxu0
    %v727 = vadd.f32 0.0, %v726
    %v728 = vpop.f32.mrb[0].mxu0
    %v729 = vpop.f32.mrb[0].mxu0
    %v730 = vadd.f32 0.0, %v729
    %v731 = vpop.f32.mrb[0].mxu0
    %732 = vmatprep.mubr.bf16.mxu0 %v459
    %733 = vmatmul.mubr.bf16.gmra.mrb[0].mxu0 %v458
    %v734 = vpop.f32.mrb[0].mxu0
    %v735 = vadd.f32 0.0, %v734
    %v736 = vpop.f32.mrb[0].mxu0
    %v737 = vpop.f32.mrb[0].mxu0
    %v738 = vadd.f32 0.0, %v737
    %v739 = vpop.f32.mrb[0].mxu0
    %740 = vmatprep.mubr.bf16.mxu0 %v461
    %741 = vmatmul.mubr.bf16.gmra.mrb[0].mxu0 %v460
    %v742 = vpop.f32.mrb[0].mxu0
    %v743 = vadd.f32 0.0, %v742
    %v744 = vpop.f32.mrb[0].mxu0
    %v745 = vpop.f32.mrb[0].mxu0
    %v746 = vadd.f32 0.0, %v745
    %v747 = vpop.f32.mrb[0].mxu0
    %748 = vmatprep.mubr.bf16.mxu0 %v463
    %749 = vmatmul.mubr.bf16.gmra.mrb[0].mxu0 %v462
    %v750 = vpop.f32.mrb[0].mxu0
    %v751 = vadd.f32 0.0, %v750
    %v752 = vpop.f32.mrb[0].mxu0
    %v753 = vpop.f32.mrb[0].mxu0
    %v754 = vadd.f32 0.0, %v753
    %v755 = vpop.f32.mrb[0].mxu0
    %756 = vmatprep.mubr.bf16.mxu0 %v465
    %757 = vmatmul.mubr.bf16.gmra.mrb[0].mxu0 %v464
    %v758 = vpop.f32.mrb[0].mxu0
    %v759 = vadd.f32 0.0, %v758
    %v760 = vpop.f32.mrb[0].mxu0
    %v761 = vpop.f32.mrb[0].mxu0
    %v762 = vadd.f32 0.0, %v761
    %v763 = vpop.f32.mrb[0].mxu0
    %764 = vmatprep.mubr.bf16.mxu0 %v467
    %765 = vmatmul.mubr.bf16.gmra.mrb[0].mxu0 %v466
    %v766 = vpop.f32.mrb[0].mxu0
    %v767 = vadd.f32 0.0, %v766
    %v768 = vpop.f32.mrb[0].mxu0
    %v769 = vpop.f32.mrb[0].mxu0
    %v770 = vadd.f32 0.0, %v769
    %v771 = vpop.f32.mrb[0].mxu0
    %772 = vmatprep.mubr.bf16.mxu0 %v469
    %773 = vmatmul.mubr.bf16.gmra.mrb[0].mxu0 %v468
    %v774 = vpop.f32.mrb[0].mxu0
    %v775 = vadd.f32 0.0, %v774
    %v776 = vpop.f32.mrb[0].mxu0
    %v777 = vpop.f32.mrb[0].mxu0
    %v778 = vadd.f32 0.0, %v777
    %v779 = vpop.f32.mrb[0].mxu0
    %780 = vmatprep.mubr.bf16.mxu0 %v471
    %781 = vmatmul.mubr.bf16.gmra.mrb[0].mxu0 %v470
    %v782 = vpop.f32.mrb[0].mxu0
    %v783 = vadd.f32 0.0, %v782
    %v784 = vpop.f32.mrb[0].mxu0
    %v785 = vpop.f32.mrb[0].mxu0
    %v786 = vadd.f32 0.0, %v785
    %v787 = vpop.f32.mrb[0].mxu0
    %788 = vmatprep.mubr.bf16.mxu0 %v473
    %789 = vmatmul.mubr.bf16.gmra.mrb[0].mxu0 %v472
    %v790 = vpop.f32.mrb[0].mxu0
    %v791 = vadd.f32 0.0, %v790
    %v792 = vpop.f32.mrb[0].mxu0
    %v793 = vpop.f32.mrb[0].mxu0
    %v794 = vadd.f32 0.0, %v793
    %v795 = vpop.f32.mrb[0].mxu0
    %796 = vmatprep.mubr.bf16.mxu0 %v475
    %797 = vmatmul.mubr.bf16.gmra.mrb[0].mxu0 %v474
    %v798 = vpop.f32.mrb[0].mxu0
    %v799 = vadd.f32 0.0, %v798
    %v800 = vpop.f32.mrb[0].mxu0
    %v801 = vpop.f32.mrb[0].mxu0
    %v802 = vadd.f32 0.0, %v801
    %v803 = vpop.f32.mrb[0].mxu0
    %804 = vmatprep.mubr.bf16.mxu0 %v477
    %805 = vmatmul.mubr.bf16.gmra.mrb[0].mxu0 %v476
    %v806 = vpop.f32.mrb[0].mxu0
    %v807 = vadd.f32 0.0, %v806
    %v808 = vpop.f32.mrb[0].mxu0
    %v809 = vpop.f32.mrb[0].mxu0
    %v810 = vadd.f32 0.0, %v809
    %v811 = vpop.f32.mrb[0].mxu0
    %812 = vmatprep.mubr.bf16.mxu0 %v479
    %813 = vmatmul.mubr.bf16.gmra.mrb[0].mxu0 %v478
    %v814 = vpop.f32.mrb[0].mxu0
    %v815 = vadd.f32 0.0, %v814
    %v816 = vpop.f32.mrb[0].mxu0
    %v817 = vpop.f32.mrb[0].mxu0
    %v818 = vadd.f32 0.0, %v817
    %v819 = vpop.f32.mrb[0].mxu0
    %820 = vmatprep.mubr.bf16.mxu0 %v481
    %821 = vmatmul.mubr.bf16.gmra.mrb[0].mxu0 %v480
    %v822 = vpop.f32.mrb[0].mxu0
    %v823 = vadd.f32 0.0, %v822
    %v824 = vpop.f32.mrb[0].mxu0
    %v825 = vpop.f32.mrb[0].mxu0
    %v826 = vadd.f32 0.0, %v825
    %v827 = vpop.f32.mrb[0].mxu0
    %828 = vmatprep.mubr.bf16.mxu0 %v483
    %829 = vmatmul.mubr.bf16.gmra.mrb[0].mxu0 %v482
    %v830 = vpop.f32.mrb[0].mxu0
    %v831 = vadd.f32 0.0, %v830
    %v832 = vpop.f32.mrb[0].mxu0
    %v833 = vpop.f32.mrb[0].mxu0
    %v834 = vadd.f32 0.0, %v833
    %v835 = vpop.f32.mrb[0].mxu0
    %836 = vmatprep.mubr.bf16.mxu0 %v485
    %837 = vmatmul.mubr.bf16.gmra.mrb[0].mxu0 %v484
    %v838 = vpop.f32.mrb[0].mxu0
    %v839 = vadd.f32 0.0, %v838
    %v840 = vpop.f32.mrb[0].mxu0
    %v841 = vpop.f32.mrb[0].mxu0
    %v842 = vadd.f32 0.0, %v841
    %v843 = vpop.f32.mrb[0].mxu0
    %844 = vmatprep.mubr.bf16.mxu0 %v487
    %845 = vmatmul.mubr.bf16.gmra.mrb[0].mxu0 %v486
    %v846 = vpop.f32.mrb[0].mxu0
    %v847 = vadd.f32 0.0, %v846
    %v848 = vpop.f32.mrb[0].mxu0
    %v849 = vpop.f32.mrb[0].mxu0
    %v850 = vadd.f32 0.0, %v849
    %v851 = vpop.f32.mrb[0].mxu0
    %852 = vmatprep.mubr.bf16.mxu0 %v489
    %853 = vmatmul.mubr.bf16.gmra.mrb[0].mxu0 %v488
    %v854 = vpop.f32.mrb[0].mxu0
    %v855 = vadd.f32 0.0, %v854
    %v856 = vpop.f32.mrb[0].mxu0
    %v857 = vpop.f32.mrb[0].mxu0
    %v858 = vadd.f32 0.0, %v857
    %v859 = vpop.f32.mrb[0].mxu0
    %860 = vmatprep.mubr.bf16.mxu0 %v491
    %861 = vmatmul.mubr.bf16.gmra.mrb[0].mxu0 %v490
    %v862 = vpop.f32.mrb[0].mxu0
    %v863 = vadd.f32 0.0, %v862
    %v864 = vpop.f32.mrb[0].mxu0
    %v865 = vpop.f32.mrb[0].mxu0
    %v866 = vadd.f32 0.0, %v865
    %v867 = vpop.f32.mrb[0].mxu0
    %868 = vmatprep.mubr.bf16.mxu0 %v493
    %869 = vmatmul.mubr.bf16.gmra.mrb[0].mxu0 %v492
    %v870 = vpop.f32.mrb[0].mxu0
    %v871 = vadd.f32 0.0, %v870
    %v872 = vpop.f32.mrb[0].mxu0
    %v873 = vpop.f32.mrb[0].mxu0
    %v874 = vadd.f32 0.0, %v873
    %v875 = vpop.f32.mrb[0].mxu0
    %876 = vmatprep.mubr.bf16.mxu0 %v495
    %877 = vmatmul.mubr.bf16.gmra.mrb[0].mxu0 %v494
    %v878 = vpop.f32.mrb[0].mxu0
    %v879 = vadd.f32 0.0, %v878
    %v880 = vpop.f32.mrb[0].mxu0
    %v881 = vpop.f32.mrb[0].mxu0
    %v882 = vadd.f32 0.0, %v881
    %v883 = vpop.f32.mrb[0].mxu0
    %884 = vmatprep.mubr.bf16.mxu0 %v497
    %885 = vmatmul.mubr.bf16.gmra.mrb[0].mxu0 %v496
    %v886 = vpop.f32.mrb[0].mxu0
    %v887 = vadd.f32 0.0, %v886
    %v888 = vpop.f32.mrb[0].mxu0
    %v889 = vpop.f32.mrb[0].mxu0
    %v890 = vadd.f32 0.0, %v889
    %v891 = vpop.f32.mrb[0].mxu0
    %892 = vmatprep.mubr.bf16.mxu0 %v499
    %893 = vmatmul.mubr.bf16.gmra.mrb[0].mxu0 %v498
    %v894 = vpop.f32.mrb[0].mxu0
    %v895 = vadd.f32 0.0, %v894
    %v896 = vpop.f32.mrb[0].mxu0
    %v897 = vpop.f32.mrb[0].mxu0
    %v898 = vadd.f32 0.0, %v897
    %v899 = vpop.f32.mrb[0].mxu0
    %900 = vmatprep.mubr.bf16.mxu0 %v501
    %901 = vmatmul.mubr.bf16.gmra.mrb[0].mxu0 %v500
    %v902 = vpop.f32.mrb[0].mxu0
    %v903 = vadd.f32 0.0, %v902
    %v904 = vpop.f32.mrb[0].mxu0
    %v905 = vpop.f32.mrb[0].mxu0
    %v906 = vadd.f32 0.0, %v905
    %v907 = vpop.f32.mrb[0].mxu0
    %908 = vmatprep.mubr.bf16.mxu0 %v503
    %909 = vmatmul.mubr.bf16.gmra.mrb[0].mxu0 %v502
    %v910 = vpop.f32.mrb[0].mxu0
    %v911 = vadd.f32 0.0, %v910
    %v912 = vpop.f32.mrb[0].mxu0
    %v913 = vpop.f32.mrb[0].mxu0
    %v914 = vadd.f32 0.0, %v913
    %v915 = vpop.f32.mrb[0].mxu0
    %916 = vmatprep.mubr.bf16.mxu0 %v505
    %917 = vmatmul.mubr.bf16.gmra.mrb[0].mxu0 %v504
    %v918 = vpop.f32.mrb[0].mxu0
    %v919 = vadd.f32 0.0, %v918
    %v920 = vpop.f32.mrb[0].mxu0
    %v921 = vpop.f32.mrb[0].mxu0
    %v922 = vadd.f32 0.0, %v921
    %v923 = vpop.f32.mrb[0].mxu0
    %924 = vmatprep.mubr.bf16.mxu0 %v507
    %925 = vmatmul.mubr.bf16.gmra.mrb[0].mxu0 %v506
    %v926 = vpop.f32.mrb[0].mxu0
    %v927 = vadd.f32 0.0, %v926
    %v928 = vpop.f32.mrb[0].mxu0
    %v929 = vpop.f32.mrb[0].mxu0
    %v930 = vadd.f32 0.0, %v929
    %v931 = vpop.f32.mrb[0].mxu0
    %932 = vmatprep.mubr.bf16.mxu0 %v509
    %933 = vmatmul.mubr.bf16.gmra.mrb[0].mxu0 %v508
    %v934 = vpop.f32.mrb[0].mxu0
    %v935 = vadd.f32 0.0, %v934
    %v936 = vpop.f32.mrb[0].mxu0
    %v937 = vpop.f32.mrb[0].mxu0
    %v938 = vadd.f32 0.0, %v937
    %v939 = vpop.f32.mrb[0].mxu0
    %940 = vmatprep.mubr.bf16.mxu0 %v511
    %941 = vmatmul.mubr.bf16.gmra.mrb[0].mxu0 %v510
    %v942 = vpop.f32.mrb[0].mxu0
    %v943 = vadd.f32 0.0, %v942
    %v944 = vpop.f32.mrb[0].mxu0
    %v945 = vpop.f32.mrb[0].mxu0
    %v946 = vadd.f32 0.0, %v945
    %v947 = vpop.f32.mrb[0].mxu0
    %948 = vmatprep.mubr.bf16.mxu0 %v513
    %949 = vmatmul.mubr.bf16.gmra.mrb[0].mxu0 %v512
    %v950 = vpop.f32.mrb[0].mxu0
    %v951 = vadd.f32 0.0, %v950
    %v952 = vpop.f32.mrb[0].mxu0
    %v953 = vpop.f32.mrb[0].mxu0
    %v954 = vadd.f32 0.0, %v953
    %v955 = vpop.f32.mrb[0].mxu0
    %956 = vmatprep.mubr.bf16.mxu0 %v515
    %957 = vmatmul.mubr.bf16.gmra.mrb[0].mxu0 %v514
    %v958 = vpop.f32.mrb[0].mxu0
    %v959 = vadd.f32 0.0, %v958
    %v960 = vpop.f32.mrb[0].mxu0
    %v961 = vpop.f32.mrb[0].mxu0
    %v962 = vadd.f32 0.0, %v961
    %v963 = vpop.f32.mrb[0].mxu0
    %964 = vdwg.mxu0
    %v965 = vadd.f32 %v100, %v711
    %v966 = vadd.f32 %v101, %v714
    %v967 = vadd.f32 %v102, %v719
    %v968 = vadd.f32 %v103, %v722
    %v969 = vadd.f32 %v104, %v727
    %v970 = vadd.f32 %v105, %v730
    %v971 = vadd.f32 %v106, %v735
    %v972 = vadd.f32 %v107, %v738
    %v973 = vadd.f32 %v108, %v743
    %v974 = vadd.f32 %v109, %v746
    %v975 = vadd.f32 %v110, %v751
    %v976 = vadd.f32 %v111, %v754
    %v977 = vadd.f32 %v112, %v759
    %v978 = vadd.f32 %v113, %v762
    %v979 = vadd.f32 %v114, %v767
    %v980 = vadd.f32 %v115, %v770
    %v981 = vadd.f32 %v116, %v775
    %v982 = vadd.f32 %v117, %v778
    %v983 = vadd.f32 %v118, %v783
    %v984 = vadd.f32 %v119, %v786
    %v985 = vadd.f32 %v120, %v791
    %v986 = vadd.f32 %v121, %v794
    %v987 = vadd.f32 %v122, %v799
    %v988 = vadd.f32 %v123, %v802
    %v989 = vadd.f32 %v124, %v807
    %v990 = vadd.f32 %v125, %v810
    %v991 = vadd.f32 %v126, %v815
    %v992 = vadd.f32 %v127, %v818
    %v993 = vadd.f32 %v128, %v823
    %v994 = vadd.f32 %v129, %v826
    %v995 = vadd.f32 %v130, %v831
    %v996 = vadd.f32 %v131, %v834
    %v997 = vadd.f32 %v132, %v839
    %v998 = vadd.f32 %v133, %v842
    %v999 = vadd.f32 %v134, %v847
    %v1000 = vadd.f32 %v135, %v850
    %v1001 = vadd.f32 %v136, %v855
    %v1002 = vadd.f32 %v137, %v858
    %v1003 = vadd.f32 %v138, %v863
    %v1004 = vadd.f32 %v139, %v866
    %v1005 = vadd.f32 %v140, %v871
    %v1006 = vadd.f32 %v141, %v874
    %v1007 = vadd.f32 %v142, %v879
    %v1008 = vadd.f32 %v143, %v882
    %v1009 = vadd.f32 %v144, %v887
    %v1010 = vadd.f32 %v145, %v890
    %v1011 = vadd.f32 %v146, %v895
    %v1012 = vadd.f32 %v147, %v898
    %v1013 = vadd.f32 %v148, %v903
    %v1014 = vadd.f32 %v149, %v906
    %v1015 = vadd.f32 %v150, %v911
    %v1016 = vadd.f32 %v151, %v914
    %v1017 = vadd.f32 %v152, %v919
    %v1018 = vadd.f32 %v153, %v922
    %v1019 = vadd.f32 %v154, %v927
    %v1020 = vadd.f32 %v155, %v930
    %v1021 = vadd.f32 %v156, %v935
    %v1022 = vadd.f32 %v157, %v938
    %v1023 = vadd.f32 %v158, %v943
    %v1024 = vadd.f32 %v159, %v946
    %v1025 = vadd.f32 %v160, %v951
    %v1026 = vadd.f32 %v161, %v954
    %v1027 = vadd.f32 %v162, %v959
    %v1028 = vadd.f32 %v163, %v962
    %vm1029 = vcmask 523264
    %1030 = vst.msk [vmem:[#allocation2] sm:$0xff] %vm1029, %v965
    %1031 = vst.msk [vmem:[#allocation2 + $0x8] sm:$0xff] %vm1029, %v966
    %1032 = vst.msk [vmem:[#allocation2 + $0x10] sm:$0xff] %vm1029, %v967
    %1033 = vst.msk [vmem:[#allocation2 + $0x18] sm:$0xff] %vm1029, %v968
    %1034 = vst.msk [vmem:[#allocation2 + $0x20] sm:$0xff] %vm1029, %v969
    %1035 = vst.msk [vmem:[#allocation2 + $0x28] sm:$0xff] %vm1029, %v970
    %1036 = vst.msk [vmem:[#allocation2 + $0x30] sm:$0xff] %vm1029, %v971
    %1037 = vst.msk [vmem:[#allocation2 + $0x38] sm:$0xff] %vm1029, %v972
    %1038 = vst.msk [vmem:[#allocation2 + $0x40] sm:$0xff] %vm1029, %v973
    %1039 = vst.msk [vmem:[#allocation2 + $0x48] sm:$0xff] %vm1029, %v974
    %1040 = vst.msk [vmem:[#allocation2 + $0x50] sm:$0xff] %vm1029, %v975
    %1041 = vst.msk [vmem:[#allocation2 + $0x58] sm:$0xff] %vm1029, %v976
    %1042 = vst.msk [vmem:[#allocation2 + $0x60] sm:$0xff] %vm1029, %v977
    %1043 = vst.msk [vmem:[#allocation2 + $0x68] sm:$0xff] %vm1029, %v978
    %1044 = vst.msk [vmem:[#allocation2 + $0x70] sm:$0xff] %vm1029, %v979
    %1045 = vst.msk [vmem:[#allocation2 + $0x78] sm:$0xff] %vm1029, %v980
    %1046 = vst.msk [vmem:[#allocation2 + $0x80] sm:$0xff] %vm1029, %v981
    %1047 = vst.msk [vmem:[#allocation2 + $0x88] sm:$0xff] %vm1029, %v982
    %1048 = vst.msk [vmem:[#allocation2 + $0x90] sm:$0xff] %vm1029, %v983
    %1049 = vst.msk [vmem:[#allocation2 + $0x98] sm:$0xff] %vm1029, %v984
    %1050 = vst.msk [vmem:[#allocation2 + $0xa0] sm:$0xff] %vm1029, %v985
    %1051 = vst.msk [vmem:[#allocation2 + $0xa8] sm:$0xff] %vm1029, %v986
    %1052 = vst.msk [vmem:[#allocation2 + $0xb0] sm:$0xff] %vm1029, %v987
    %1053 = vst.msk [vmem:[#allocation2 + $0xb8] sm:$0xff] %vm1029, %v988
    %1054 = vst.msk [vmem:[#allocation2 + $0xc0] sm:$0xff] %vm1029, %v989
    %1055 = vst.msk [vmem:[#allocation2 + $0xc8] sm:$0xff] %vm1029, %v990
    %1056 = vst.msk [vmem:[#allocation2 + $0xd0] sm:$0xff] %vm1029, %v991
    %1057 = vst.msk [vmem:[#allocation2 + $0xd8] sm:$0xff] %vm1029, %v992
    %1058 = vst.msk [vmem:[#allocation2 + $0xe0] sm:$0xff] %vm1029, %v993
    %1059 = vst.msk [vmem:[#allocation2 + $0xe8] sm:$0xff] %vm1029, %v994
    %1060 = vst.msk [vmem:[#allocation2 + $0xf0] sm:$0xff] %vm1029, %v995
    %1061 = vst.msk [vmem:[#allocation2 + $0xf8] sm:$0xff] %vm1029, %v996
    %1062 = vst.msk [vmem:[#allocation2 + $0x100] sm:$0xff] %vm1029, %v997
    %1063 = vst.msk [vmem:[#allocation2 + $0x108] sm:$0xff] %vm1029, %v998
    %1064 = vst.msk [vmem:[#allocation2 + $0x110] sm:$0xff] %vm1029, %v999
    %1065 = vst.msk [vmem:[#allocation2 + $0x118] sm:$0xff] %vm1029, %v1000
    %1066 = vst.msk [vmem:[#allocation2 + $0x120] sm:$0xff] %vm1029, %v1001
    %1067 = vst.msk [vmem:[#allocation2 + $0x128] sm:$0xff] %vm1029, %v1002
    %1068 = vst.msk [vmem:[#allocation2 + $0x130] sm:$0xff] %vm1029, %v1003
    %1069 = vst.msk [vmem:[#allocation2 + $0x138] sm:$0xff] %vm1029, %v1004
    %1070 = vst.msk [vmem:[#allocation2 + $0x140] sm:$0xff] %vm1029, %v1005
    %1071 = vst.msk [vmem:[#allocation2 + $0x148] sm:$0xff] %vm1029, %v1006
    %1072 = vst.msk [vmem:[#allocation2 + $0x150] sm:$0xff] %vm1029, %v1007
    %1073 = vst.msk [vmem:[#allocation2 + $0x158] sm:$0xff] %vm1029, %v1008
    %1074 = vst.msk [vmem:[#allocation2 + $0x160] sm:$0xff] %vm1029, %v1009
    %1075 = vst.msk [vmem:[#allocation2 + $0x168] sm:$0xff] %vm1029, %v1010
    %1076 = vst.msk [vmem:[#allocation2 + $0x170] sm:$0xff] %vm1029, %v1011
    %1077 = vst.msk [vmem:[#allocation2 + $0x178] sm:$0xff] %vm1029, %v1012
    %1078 = vst.msk [vmem:[#allocation2 + $0x180] sm:$0xff] %vm1029, %v1013
    %1079 = vst.msk [vmem:[#allocation2 + $0x188] sm:$0xff] %vm1029, %v1014
    %1080 = vst.msk [vmem:[#allocation2 + $0x190] sm:$0xff] %vm1029, %v1015
    %1081 = vst.msk [vmem:[#allocation2 + $0x198] sm:$0xff] %vm1029, %v1016
    %1082 = vst.msk [vmem:[#allocation2 + $0x1a0] sm:$0xff] %vm1029, %v1017
    %1083 = vst.msk [vmem:[#allocation2 + $0x1a8] sm:$0xff] %vm1029, %v1018
    %1084 = vst.msk [vmem:[#allocation2 + $0x1b0] sm:$0xff] %vm1029, %v1019
    %1085 = vst.msk [vmem:[#allocation2 + $0x1b8] sm:$0xff] %vm1029, %v1020
    %1086 = vst.msk [vmem:[#allocation2 + $0x1c0] sm:$0xff] %vm1029, %v1021
    %1087 = vst.msk [vmem:[#allocation2 + $0x1c8] sm:$0xff] %vm1029, %v1022
    %1088 = vst.msk [vmem:[#allocation2 + $0x1d0] sm:$0xff] %vm1029, %v1023
    %1089 = vst.msk [vmem:[#allocation2 + $0x1d8] sm:$0xff] %vm1029, %v1024
    %1090 = vst.msk [vmem:[#allocation2 + $0x1e0] sm:$0xff] %vm1029, %v1025
    %1091 = vst.msk [vmem:[#allocation2 + $0x1e8] sm:$0xff] %vm1029, %v1026
    %1092 = vst.msk [vmem:[#allocation2 + $0x1f0] sm:$0xff] %vm1029, %v1027
    %1093 = vst.msk [vmem:[#allocation2 + $0x1f8] sm:$0xff] %vm1029, %v1028
    // Predicated region
    $region18: #{tpu_custom_call.1} parent=1 // pred_check
      %p1094 = pneg %p31
    $region19: #{tpu_custom_call.1} parent=1 // pred_check_branch
      %1096 = sbr.rel (%p1094) target = $region21
    $region20: #{tpu_custom_call.1} parent=1 // pred_region
      %v1097 = vld [vmem:[#allocation2] sm:$0xff]
      %v1098 = vld [vmem:[#allocation2 + $0x8] sm:$0xff]
      %v1099 = vld [vmem:[#allocation2 + $0x10] sm:$0xff]
      %v1100 = vld [vmem:[#allocation2 + $0x18] sm:$0xff]
      %v1101 = vld [vmem:[#allocation2 + $0x20] sm:$0xff]
      %v1102 = vld [vmem:[#allocation2 + $0x28] sm:$0xff]
      %v1103 = vld [vmem:[#allocation2 + $0x30] sm:$0xff]
      %v1104 = vld [vmem:[#allocation2 + $0x38] sm:$0xff]
      %v1105 = vld [vmem:[#allocation2 + $0x40] sm:$0xff]
      %v1106 = vld [vmem:[#allocation2 + $0x48] sm:$0xff]
      %v1107 = vld [vmem:[#allocation2 + $0x50] sm:$0xff]
      %v1108 = vld [vmem:[#allocation2 + $0x58] sm:$0xff]
      %v1109 = vld [vmem:[#allocation2 + $0x60] sm:$0xff]
      %v1110 = vld [vmem:[#allocation2 + $0x68] sm:$0xff]
      %v1111 = vld [vmem:[#allocation2 + $0x70] sm:$0xff]
      %v1112 = vld [vmem:[#allocation2 + $0x78] sm:$0xff]
      %v1113 = vld [vmem:[#allocation2 + $0x80] sm:$0xff]
      %v1114 = vld [vmem:[#allocation2 + $0x88] sm:$0xff]
      %v1115 = vld [vmem:[#allocation2 + $0x90] sm:$0xff]
      %v1116 = vld [vmem:[#allocation2 + $0x98] sm:$0xff]
      %v1117 = vld [vmem:[#allocation2 + $0xa0] sm:$0xff]
      %v1118 = vld [vmem:[#allocation2 + $0xa8] sm:$0xff]
      %v1119 = vld [vmem:[#allocation2 + $0xb0] sm:$0xff]
      %v1120 = vld [vmem:[#allocation2 + $0xb8] sm:$0xff]
      %v1121 = vld [vmem:[#allocation2 + $0xc0] sm:$0xff]
      %v1122 = vld [vmem:[#allocation2 + $0xc8] sm:$0xff]
      %v1123 = vld [vmem:[#allocation2 + $0xd0] sm:$0xff]
      %v1124 = vld [vmem:[#allocation2 + $0xd8] sm:$0xff]
      %v1125 = vld [vmem:[#allocation2 + $0xe0] sm:$0xff]
      %v1126 = vld [vmem:[#allocation2 + $0xe8] sm:$0xff]
      %v1127 = vld [vmem:[#allocation2 + $0xf0] sm:$0xff]
      %v1128 = vld [vmem:[#allocation2 + $0xf8] sm:$0xff]
      %v1129 = vld [vmem:[#allocation2 + $0x100] sm:$0xff]
      %v1130 = vld [vmem:[#allocation2 + $0x108] sm:$0xff]
      %v1131 = vld [vmem:[#allocation2 + $0x110] sm:$0xff]
      %v1132 = vld [vmem:[#allocation2 + $0x118] sm:$0xff]
      %v1133 = vld [vmem:[#allocation2 + $0x120] sm:$0xff]
      %v1134 = vld [vmem:[#allocation2 + $0x128] sm:$0xff]
      %v1135 = vld [vmem:[#allocation2 + $0x130] sm:$0xff]
      %v1136 = vld [vmem:[#allocation2 + $0x138] sm:$0xff]
      %v1137 = vld [vmem:[#allocation2 + $0x140] sm:$0xff]
      %v1138 = vld [vmem:[#allocation2 + $0x148] sm:$0xff]
      %v1139 = vld [vmem:[#allocation2 + $0x150] sm:$0xff]
      %v1140 = vld [vmem:[#allocation2 + $0x158] sm:$0xff]
      %v1141 = vld [vmem:[#allocation2 + $0x160] sm:$0xff]
      %v1142 = vld [vmem:[#allocation2 + $0x168] sm:$0xff]
      %v1143 = vld [vmem:[#allocation2 + $0x170] sm:$0xff]
      %v1144 = vld [vmem:[#allocation2 + $0x178] sm:$0xff]
      %v1145 = vld [vmem:[#allocation2 + $0x180] sm:$0xff]
      %v1146 = vld [vmem:[#allocation2 + $0x188] sm:$0xff]
      %v1147 = vld [vmem:[#allocation2 + $0x190] sm:$0xff]
      %v1148 = vld [vmem:[#allocation2 + $0x198] sm:$0xff]
      %v1149 = vld [vmem:[#allocation2 + $0x1a0] sm:$0xff]
      %v1150 = vld [vmem:[#allocation2 + $0x1a8] sm:$0xff]
      %v1151 = vld [vmem:[#allocation2 + $0x1b0] sm:$0xff]
      %v1152 = vld [vmem:[#allocation2 + $0x1b8] sm:$0xff]
      %v1153 = vld [vmem:[#allocation2 + $0x1c0] sm:$0xff]
      %v1154 = vld [vmem:[#allocation2 + $0x1c8] sm:$0xff]
      %v1155 = vld [vmem:[#allocation2 + $0x1d0] sm:$0xff]
      %v1156 = vld [vmem:[#allocation2 + $0x1d8] sm:$0xff]
      %v1157 = vld [vmem:[#allocation2 + $0x1e0] sm:$0xff]
      %v1158 = vld [vmem:[#allocation2 + $0x1e8] sm:$0xff]
      %v1159 = vld [vmem:[#allocation2 + $0x1f0] sm:$0xff]
      %v1160 = vld [vmem:[#allocation2 + $0x1f8] sm:$0xff]
      %v1161 = vpack.c.bf16 %v1098, %v1097
      %v1162 = vpack.c.bf16 %v1100, %v1099
      %v1163 = vpack.c.bf16 %v1102, %v1101
      %v1164 = vpack.c.bf16 %v1104, %v1103
      %v1165 = vpack.c.bf16 %v1106, %v1105
      %v1166 = vpack.c.bf16 %v1108, %v1107
      %v1167 = vpack.c.bf16 %v1110, %v1109
      %v1168 = vpack.c.bf16 %v1112, %v1111
      %v1169 = vpack.c.bf16 %v1114, %v1113
      %v1170 = vpack.c.bf16 %v1116, %v1115
      %v1171 = vpack.c.bf16 %v1118, %v1117
      %v1172 = vpack.c.bf16 %v1120, %v1119
      %v1173 = vpack.c.bf16 %v1122, %v1121
      %v1174 = vpack.c.bf16 %v1124, %v1123
      %v1175 = vpack.c.bf16 %v1126, %v1125
      %v1176 = vpack.c.bf16 %v1128, %v1127
      %v1177 = vpack.c.bf16 %v1130, %v1129
      %v1178 = vpack.c.bf16 %v1132, %v1131
      %v1179 = vpack.c.bf16 %v1134, %v1133
      %v1180 = vpack.c.bf16 %v1136, %v1135
      %v1181 = vpack.c.bf16 %v1138, %v1137
      %v1182 = vpack.c.bf16 %v1140, %v1139
      %v1183 = vpack.c.bf16 %v1142, %v1141
      %v1184 = vpack.c.bf16 %v1144, %v1143
      %v1185 = vpack.c.bf16 %v1146, %v1145
      %v1186 = vpack.c.bf16 %v1148, %v1147
      %v1187 = vpack.c.bf16 %v1150, %v1149
      %v1188 = vpack.c.bf16 %v1152, %v1151
      %v1189 = vpack.c.bf16 %v1154, %v1153
      %v1190 = vpack.c.bf16 %v1156, %v1155
      %v1191 = vpack.c.bf16 %v1158, %v1157
      %v1192 = vpack.c.bf16 %v1160, %v1159
      %v1225 = vunpack.c.l.b16 %v1161
      %v1226 = vunpack.c.h.b16 %v1161
      %v1227 = vunpack.c.l.b16 %v1162
      %v1228 = vunpack.c.h.b16 %v1162
      %v1229 = vunpack.c.l.b16 %v1163
      %v1230 = vunpack.c.h.b16 %v1163
      %v1231 = vunpack.c.l.b16 %v1164
      %v1232 = vunpack.c.h.b16 %v1164
      %v1233 = vunpack.c.l.b16 %v1165
      %v1234 = vunpack.c.h.b16 %v1165
      %v1235 = vunpack.c.l.b16 %v1166
      %v1236 = vunpack.c.h.b16 %v1166
      %v1237 = vunpack.c.l.b16 %v1167
      %v1238 = vunpack.c.h.b16 %v1167
      %v1239 = vunpack.c.l.b16 %v1168
      %v1240 = vunpack.c.h.b16 %v1168
      %v1241 = vunpack.c.l.b16 %v1169
      %v1242 = vunpack.c.h.b16 %v1169
      %v1243 = vunpack.c.l.b16 %v1170
      %v1244 = vunpack.c.h.b16 %v1170
      %v1245 = vunpack.c.l.b16 %v1171
      %v1246 = vunpack.c.h.b16 %v1171
      %v1247 = vunpack.c.l.b16 %v1172
      %v1248 = vunpack.c.h.b16 %v1172
      %v1249 = vunpack.c.l.b16 %v1173
      %v1250 = vunpack.c.h.b16 %v1173
      %v1251 = vunpack.c.l.b16 %v1174
      %v1252 = vunpack.c.h.b16 %v1174
      %v1253 = vunpack.c.l.b16 %v1175
      %v1254 = vunpack.c.h.b16 %v1175
      %v1255 = vunpack.c.l.b16 %v1176
      %v1256 = vunpack.c.h.b16 %v1176
      %v1257 = vunpack.c.l.b16 %v1177
      %v1258 = vunpack.c.h.b16 %v1177
      %v1259 = vunpack.c.l.b16 %v1178
      %v1260 = vunpack.c.h.b16 %v1178
      %v1261 = vunpack.c.l.b16 %v1179
      %v1262 = vunpack.c.h.b16 %v1179
      %v1263 = vunpack.c.l.b16 %v1180
      %v1264 = vunpack.c.h.b16 %v1180
      %v1265 = vunpack.c.l.b16 %v1181
      %v1266 = vunpack.c.h.b16 %v1181
      %v1267 = vunpack.c.l.b16 %v1182
      %v1268 = vunpack.c.h.b16 %v1182
      %v1269 = vunpack.c.l.b16 %v1183
      %v1270 = vunpack.c.h.b16 %v1183
      %v1271 = vunpack.c.l.b16 %v1184
      %v1272 = vunpack.c.h.b16 %v1184
      %v1273 = vunpack.c.l.b16 %v1185
      %v1274 = vunpack.c.h.b16 %v1185
      %v1275 = vunpack.c.l.b16 %v1186
      %v1276 = vunpack.c.h.b16 %v1186
      %v1277 = vunpack.c.l.b16 %v1187
      %v1278 = vunpack.c.h.b16 %v1187
      %v1279 = vunpack.c.l.b16 %v1188
      %v1280 = vunpack.c.h.b16 %v1188
      %v1281 = vunpack.c.l.b16 %v1189
      %v1282 = vunpack.c.h.b16 %v1189
      %v1283 = vunpack.c.l.b16 %v1190
      %v1284 = vunpack.c.h.b16 %v1190
      %v1285 = vunpack.c.l.b16 %v1191
      %v1286 = vunpack.c.h.b16 %v1191
      %v1287 = vunpack.c.l.b16 %v1192
      %v1288 = vunpack.c.h.b16 %v1192
      %v1289 = vpack.c.b16 %v1225, %v1225
      %v1290 = vpack.c.b16 %v1226, %v1226
      %v1291 = vpack.c.b16 %v1227, %v1227
      %v1292 = vpack.c.b16 %v1228, %v1228
      %v1293 = vpack.c.b16 %v1229, %v1229
      %v1294 = vpack.c.b16 %v1230, %v1230
      %v1295 = vpack.c.b16 %v1231, %v1231
      %v1296 = vpack.c.b16 %v1232, %v1232
      %v1297 = vpack.c.b16 %v1233, %v1233
      %v1298 = vpack.c.b16 %v1234, %v1234
      %v1299 = vpack.c.b16 %v1235, %v1235
      %v1300 = vpack.c.b16 %v1236, %v1236
      %v1301 = vpack.c.b16 %v1237, %v1237
      %v1302 = vpack.c.b16 %v1238, %v1238
      %v1303 = vpack.c.b16 %v1239, %v1239
      %v1304 = vpack.c.b16 %v1240, %v1240
      %v1305 = vpack.c.b16 %v1241, %v1241
      %v1306 = vpack.c.b16 %v1242, %v1242
      %v1307 = vpack.c.b16 %v1243, %v1243
      %v1308 = vpack.c.b16 %v1244, %v1244
      %v1309 = vpack.c.b16 %v1245, %v1245
      %v1310 = vpack.c.b16 %v1246, %v1246
      %v1311 = vpack.c.b16 %v1247, %v1247
      %v1312 = vpack.c.b16 %v1248, %v1248
      %v1313 = vpack.c.b16 %v1249, %v1249
      %v1314 = vpack.c.b16 %v1250, %v1250
      %v1315 = vpack.c.b16 %v1251, %v1251
      %v1316 = vpack.c.b16 %v1252, %v1252
      %v1317 = vpack.c.b16 %v1253, %v1253
      %v1318 = vpack.c.b16 %v1254, %v1254
      %v1319 = vpack.c.b16 %v1255, %v1255
      %v1320 = vpack.c.b16 %v1256, %v1256
      %v1321 = vpack.c.b16 %v1257, %v1257
      %v1322 = vpack.c.b16 %v1258, %v1258
      %v1323 = vpack.c.b16 %v1259, %v1259
      %v1324 = vpack.c.b16 %v1260, %v1260
      %v1325 = vpack.c.b16 %v1261, %v1261
      %v1326 = vpack.c.b16 %v1262, %v1262
      %v1327 = vpack.c.b16 %v1263, %v1263
      %v1328 = vpack.c.b16 %v1264, %v1264
      %v1329 = vpack.c.b16 %v1265, %v1265
      %v1330 = vpack.c.b16 %v1266, %v1266
      %v1331 = vpack.c.b16 %v1267, %v1267
      %v1332 = vpack.c.b16 %v1268, %v1268
      %v1333 = vpack.c.b16 %v1269, %v1269
      %v1334 = vpack.c.b16 %v1270, %v1270
      %v1335 = vpack.c.b16 %v1271, %v1271
      %v1336 = vpack.c.b16 %v1272, %v1272
      %v1337 = vpack.c.b16 %v1273, %v1273
      %v1338 = vpack.c.b16 %v1274, %v1274
      %v1339 = vpack.c.b16 %v1275, %v1275
      %v1340 = vpack.c.b16 %v1276, %v1276
      %v1341 = vpack.c.b16 %v1277, %v1277
      %v1342 = vpack.c.b16 %v1278, %v1278
      %v1343 = vpack.c.b16 %v1279, %v1279
      %v1344 = vpack.c.b16 %v1280, %v1280
      %v1345 = vpack.c.b16 %v1281, %v1281
      %v1346 = vpack.c.b16 %v1282, %v1282
      %v1347 = vpack.c.b16 %v1283, %v1283
      %v1348 = vpack.c.b16 %v1284, %v1284
      %v1349 = vpack.c.b16 %v1285, %v1285
      %v1350 = vpack.c.b16 %v1286, %v1286
      %v1351 = vpack.c.b16 %v1287, %v1287
      %v1352 = vpack.c.b16 %v1288, %v1288
      %vm1417 = vcmask 519168
      %1418 = vst.msk [vmem:[%s2] sm:$0xf] %vm1417, %v1289
      %1419 = vst.msk [vmem:[%s2 + $0x4] sm:$0xf] %vm1417, %v1290
      %1420 = vst.msk [vmem:[%s2 + $0x8] sm:$0xf] %vm1417, %v1291
      %1421 = vst.msk [vmem:[%s2 + $0xc] sm:$0xf] %vm1417, %v1292
      %1422 = vst.msk [vmem:[%s2 + $0x10] sm:$0xf] %vm1417, %v1293
      %1423 = vst.msk [vmem:[%s2 + $0x14] sm:$0xf] %vm1417, %v1294
      %1424 = vst.msk [vmem:[%s2 + $0x18] sm:$0xf] %vm1417, %v1295
      %1425 = vst.msk [vmem:[%s2 + $0x1c] sm:$0xf] %vm1417, %v1296
      %1426 = vst.msk [vmem:[%s2 + $0x20] sm:$0xf] %vm1417, %v1297
      %1427 = vst.msk [vmem:[%s2 + $0x24] sm:$0xf] %vm1417, %v1298
      %1428 = vst.msk [vmem:[%s2 + $0x28] sm:$0xf] %vm1417, %v1299
      %1429 = vst.msk [vmem:[%s2 + $0x2c] sm:$0xf] %vm1417, %v1300
      %1430 = vst.msk [vmem:[%s2 + $0x30] sm:$0xf] %vm1417, %v1301
      %1431 = vst.msk [vmem:[%s2 + $0x34] sm:$0xf] %vm1417, %v1302
      %1432 = vst.msk [vmem:[%s2 + $0x38] sm:$0xf] %vm1417, %v1303
      %1433 = vst.msk [vmem:[%s2 + $0x3c] sm:$0xf] %vm1417, %v1304
      %1434 = vst.msk [vmem:[%s2 + $0x40] sm:$0xf] %vm1417, %v1305
      %1435 = vst.msk [vmem:[%s2 + $0x44] sm:$0xf] %vm1417, %v1306
      %1436 = vst.msk [vmem:[%s2 + $0x48] sm:$0xf] %vm1417, %v1307
      %1437 = vst.msk [vmem:[%s2 + $0x4c] sm:$0xf] %vm1417, %v1308
      %1438 = vst.msk [vmem:[%s2 + $0x50] sm:$0xf] %vm1417, %v1309
      %1439 = vst.msk [vmem:[%s2 + $0x54] sm:$0xf] %vm1417, %v1310
      %1440 = vst.msk [vmem:[%s2 + $0x58] sm:$0xf] %vm1417, %v1311
      %1441 = vst.msk [vmem:[%s2 + $0x5c] sm:$0xf] %vm1417, %v1312
      %1442 = vst.msk [vmem:[%s2 + $0x60] sm:$0xf] %vm1417, %v1313
      %1443 = vst.msk [vmem:[%s2 + $0x64] sm:$0xf] %vm1417, %v1314
      %1444 = vst.msk [vmem:[%s2 + $0x68] sm:$0xf] %vm1417, %v1315
      %1445 = vst.msk [vmem:[%s2 + $0x6c] sm:$0xf] %vm1417, %v1316
      %1446 = vst.msk [vmem:[%s2 + $0x70] sm:$0xf] %vm1417, %v1317
      %1447 = vst.msk [vmem:[%s2 + $0x74] sm:$0xf] %vm1417, %v1318
      %1448 = vst.msk [vmem:[%s2 + $0x78] sm:$0xf] %vm1417, %v1319
      %1449 = vst.msk [vmem:[%s2 + $0x7c] sm:$0xf] %vm1417, %v1320
      %1450 = vst.msk [vmem:[%s2 + $0x80] sm:$0xf] %vm1417, %v1321
      %1451 = vst.msk [vmem:[%s2 + $0x84] sm:$0xf] %vm1417, %v1322
      %1452 = vst.msk [vmem:[%s2 + $0x88] sm:$0xf] %vm1417, %v1323
      %1453 = vst.msk [vmem:[%s2 + $0x8c] sm:$0xf] %vm1417, %v1324
      %1454 = vst.msk [vmem:[%s2 + $0x90] sm:$0xf] %vm1417, %v1325
      %1455 = vst.msk [vmem:[%s2 + $0x94] sm:$0xf] %vm1417, %v1326
      %1456 = vst.msk [vmem:[%s2 + $0x98] sm:$0xf] %vm1417, %v1327
      %1457 = vst.msk [vmem:[%s2 + $0x9c] sm:$0xf] %vm1417, %v1328
      %1458 = vst.msk [vmem:[%s2 + $0xa0] sm:$0xf] %vm1417, %v1329
      %1459 = vst.msk [vmem:[%s2 + $0xa4] sm:$0xf] %vm1417, %v1330
      %1460 = vst.msk [vmem:[%s2 + $0xa8] sm:$0xf] %vm1417, %v1331
      %1461 = vst.msk [vmem:[%s2 + $0xac] sm:$0xf] %vm1417, %v1332
      %1462 = vst.msk [vmem:[%s2 + $0xb0] sm:$0xf] %vm1417, %v1333
      %1463 = vst.msk [vmem:[%s2 + $0xb4] sm:$0xf] %vm1417, %v1334
      %1464 = vst.msk [vmem:[%s2 + $0xb8] sm:$0xf] %vm1417, %v1335
      %1465 = vst.msk [vmem:[%s2 + $0xbc] sm:$0xf] %vm1417, %v1336
      %1466 = vst.msk [vmem:[%s2 + $0xc0] sm:$0xf] %vm1417, %v1337
      %1467 = vst.msk [vmem:[%s2 + $0xc4] sm:$0xf] %vm1417, %v1338
      %1468 = vst.msk [vmem:[%s2 + $0xc8] sm:$0xf] %vm1417, %v1339
      %1469 = vst.msk [vmem:[%s2 + $0xcc] sm:$0xf] %vm1417, %v1340
      %1470 = vst.msk [vmem:[%s2 + $0xd0] sm:$0xf] %vm1417, %v1341
      %1471 = vst.msk [vmem:[%s2 + $0xd4] sm:$0xf] %vm1417, %v1342
      %1472 = vst.msk [vmem:[%s2 + $0xd8] sm:$0xf] %vm1417, %v1343
      %1473 = vst.msk [vmem:[%s2 + $0xdc] sm:$0xf] %vm1417, %v1344
      %1474 = vst.msk [vmem:[%s2 + $0xe0] sm:$0xf] %vm1417, %v1345
      %1475 = vst.msk [vmem:[%s2 + $0xe4] sm:$0xf] %vm1417, %v1346
      %1476 = vst.msk [vmem:[%s2 + $0xe8] sm:$0xf] %vm1417, %v1347
      %1477 = vst.msk [vmem:[%s2 + $0xec] sm:$0xf] %vm1417, %v1348
      %1478 = vst.msk [vmem:[%s2 + $0xf0] sm:$0xf] %vm1417, %v1349
      %1479 = vst.msk [vmem:[%s2 + $0xf4] sm:$0xf] %vm1417, %v1350
      %1480 = vst.msk [vmem:[%s2 + $0xf8] sm:$0xf] %vm1417, %v1351
      %1481 = vst.msk [vmem:[%s2 + $0xfc] sm:$0xf] %vm1417, %v1352
      %v1482 = vsel %vm1029, %v1097, 0.0
      %v1483 = vsel %vm1029, %v1098, 0.0
      %v1484 = vadd.f32 %v1482, %v1483
      %v1485 = vsel %vm1029, %v1099, 0.0
      %v1486 = vadd.f32 %v1484, %v1485
      %v1487 = vsel %vm1029, %v1100, 0.0
      %v1488 = vadd.f32 %v1486, %v1487
      %v1489 = vsel %vm1029, %v1101, 0.0
      %v1490 = vadd.f32 %v1488, %v1489
      %v1491 = vsel %vm1029, %v1102, 0.0
      %v1492 = vadd.f32 %v1490, %v1491
      %v1493 = vsel %vm1029, %v1103, 0.0
      %v1494 = vadd.f32 %v1492, %v1493
      %v1495 = vsel %vm1029, %v1104, 0.0
      %v1496 = vadd.f32 %v1494, %v1495
      %v1497 = vsel %vm1029, %v1105, 0.0
      %v1498 = vadd.f32 %v1496, %v1497
      %v1499 = vsel %vm1029, %v1106, 0.0
      %v1500 = vadd.f32 %v1498, %v1499
      %v1501 = vsel %vm1029, %v1107, 0.0
      %v1502 = vadd.f32 %v1500, %v1501
      %v1503 = vsel %vm1029, %v1108, 0.0
      %v1504 = vadd.f32 %v1502, %v1503
      %v1505 = vsel %vm1029, %v1109, 0.0
      %v1506 = vadd.f32 %v1504, %v1505
      %v1507 = vsel %vm1029, %v1110, 0.0
      %v1508 = vadd.f32 %v1506, %v1507
      %v1509 = vsel %vm1029, %v1111, 0.0
      %v1510 = vadd.f32 %v1508, %v1509
      %v1511 = vsel %vm1029, %v1112, 0.0
      %v1512 = vadd.f32 %v1510, %v1511
      %v1513 = vsel %vm1029, %v1113, 0.0
      %v1514 = vadd.f32 %v1512, %v1513
      %v1515 = vsel %vm1029, %v1114, 0.0
      %v1516 = vadd.f32 %v1514, %v1515
      %v1517 = vsel %vm1029, %v1115, 0.0
      %v1518 = vadd.f32 %v1516, %v1517
      %v1519 = vsel %vm1029, %v1116, 0.0
      %v1520 = vadd.f32 %v1518, %v1519
      %v1521 = vsel %vm1029, %v1117, 0.0
      %v1522 = vadd.f32 %v1520, %v1521
      %v1523 = vsel %vm1029, %v1118, 0.0
      %v1524 = vadd.f32 %v1522, %v1523
      %v1525 = vsel %vm1029, %v1119, 0.0
      %v1526 = vadd.f32 %v1524, %v1525
      %v1527 = vsel %vm1029, %v1120, 0.0
      %v1528 = vadd.f32 %v1526, %v1527
      %v1529 = vsel %vm1029, %v1121, 0.0
      %v1530 = vadd.f32 %v1528, %v1529
      %v1531 = vsel %vm1029, %v1122, 0.0
      %v1532 = vadd.f32 %v1530, %v1531
      %v1533 = vsel %vm1029, %v1123, 0.0
      %v1534 = vadd.f32 %v1532, %v1533
      %v1535 = vsel %vm1029, %v1124, 0.0
      %v1536 = vadd.f32 %v1534, %v1535
      %v1537 = vsel %vm1029, %v1125, 0.0
      %v1538 = vadd.f32 %v1536, %v1537
      %v1539 = vsel %vm1029, %v1126, 0.0
      %v1540 = vadd.f32 %v1538, %v1539
      %v1541 = vsel %vm1029, %v1127, 0.0
      %v1542 = vadd.f32 %v1540, %v1541
      %v1543 = vsel %vm1029, %v1128, 0.0
      %v1544 = vadd.f32 %v1542, %v1543
      %v1545 = vsel %vm1029, %v1129, 0.0
      %v1546 = vadd.f32 %v1544, %v1545
      %v1547 = vsel %vm1029, %v1130, 0.0
      %v1548 = vadd.f32 %v1546, %v1547
      %v1549 = vsel %vm1029, %v1131, 0.0
      %v1550 = vadd.f32 %v1548, %v1549
      %v1551 = vsel %vm1029, %v1132, 0.0
      %v1552 = vadd.f32 %v1550, %v1551
      %v1553 = vsel %vm1029, %v1133, 0.0
      %v1554 = vadd.f32 %v1552, %v1553
      %v1555 = vsel %vm1029, %v1134, 0.0
      %v1556 = vadd.f32 %v1554, %v1555
      %v1557 = vsel %vm1029, %v1135, 0.0
      %v1558 = vadd.f32 %v1556, %v1557
      %v1559 = vsel %vm1029, %v1136, 0.0
      %v1560 = vadd.f32 %v1558, %v1559
      %v1561 = vsel %vm1029, %v1137, 0.0
      %v1562 = vadd.f32 %v1560, %v1561
      %v1563 = vsel %vm1029, %v1138, 0.0
      %v1564 = vadd.f32 %v1562, %v1563
      %v1565 = vsel %vm1029, %v1139, 0.0
      %v1566 = vadd.f32 %v1564, %v1565
      %v1567 = vsel %vm1029, %v1140, 0.0
      %v1568 = vadd.f32 %v1566, %v1567
      %v1569 = vsel %vm1029, %v1141, 0.0
      %v1570 = vadd.f32 %v1568, %v1569
      %v1571 = vsel %vm1029, %v1142, 0.0
      %v1572 = vadd.f32 %v1570, %v1571
      %v1573 = vsel %vm1029, %v1143, 0.0
      %v1574 = vadd.f32 %v1572, %v1573
      %v1575 = vsel %vm1029, %v1144, 0.0
      %v1576 = vadd.f32 %v1574, %v1575
      %v1577 = vsel %vm1029, %v1145, 0.0
      %v1578 = vadd.f32 %v1576, %v1577
      %v1579 = vsel %vm1029, %v1146, 0.0
      %v1580 = vadd.f32 %v1578, %v1579
      %v1581 = vsel %vm1029, %v1147, 0.0
      %v1582 = vadd.f32 %v1580, %v1581
      %v1583 = vsel %vm1029, %v1148, 0.0
      %v1584 = vadd.f32 %v1582, %v1583
      %v1585 = vsel %vm1029, %v1149, 0.0
      %v1586 = vadd.f32 %v1584, %v1585
      %v1587 = vsel %vm1029, %v1150, 0.0
      %v1588 = vadd.f32 %v1586, %v1587
      %v1589 = vsel %vm1029, %v1151, 0.0
      %v1590 = vadd.f32 %v1588, %v1589
      %v1591 = vsel %vm1029, %v1152, 0.0
      %v1592 = vadd.f32 %v1590, %v1591
      %v1593 = vsel %vm1029, %v1153, 0.0
      %v1594 = vadd.f32 %v1592, %v1593
      %v1595 = vsel %vm1029, %v1154, 0.0
      %v1596 = vadd.f32 %v1594, %v1595
      %v1597 = vsel %vm1029, %v1155, 0.0
      %v1598 = vadd.f32 %v1596, %v1597
      %v1599 = vsel %vm1029, %v1156, 0.0
      %v1600 = vadd.f32 %v1598, %v1599
      %v1601 = vsel %vm1029, %v1157, 0.0
      %v1602 = vadd.f32 %v1600, %v1601
      %v1603 = vsel %vm1029, %v1158, 0.0
      %v1604 = vadd.f32 %v1602, %v1603
      %v1605 = vsel %vm1029, %v1159, 0.0
      %v1606 = vadd.f32 %v1604, %v1605
      %v1607 = vsel %vm1029, %v1160, 0.0
      %v1608 = vadd.f32 %v1606, %v1607
      %v1609 = vrot.slane %v1608, 4
      %v1610 = vadd.f32 %v1608, %v1609
      %v1611 = vrot.slane %v1610, 2
      %v1612 = vadd.f32 %v1610, %v1611
      %v1613 = vrot.slane %v1612, 1
      %v1614 = vadd.f32 %v1612, %v1613
      %v1615 = vmul.f32 %v1097, %v1097
      %v1616 = vmul.f32 %v1098, %v1098
      %v1617 = vmul.f32 %v1099, %v1099
      %v1618 = vmul.f32 %v1100, %v1100
      %v1619 = vmul.f32 %v1101, %v1101
      %v1620 = vmul.f32 %v1102, %v1102
      %v1621 = vmul.f32 %v1103, %v1103
      %v1622 = vmul.f32 %v1104, %v1104
      %v1623 = vmul.f32 %v1105, %v1105
      %v1624 = vmul.f32 %v1106, %v1106
      %v1625 = vmul.f32 %v1107, %v1107
      %v1626 = vmul.f32 %v1108, %v1108
      %v1627 = vmul.f32 %v1109, %v1109
      %v1628 = vmul.f32 %v1110, %v1110
      %v1629 = vmul.f32 %v1111, %v1111
      %v1630 = vmul.f32 %v1112, %v1112
      %v1631 = vmul.f32 %v1113, %v1113
      %v1632 = vmul.f32 %v1114, %v1114
      %v1633 = vmul.f32 %v1115, %v1115
      %v1634 = vmul.f32 %v1116, %v1116
      %v1635 = vmul.f32 %v1117, %v1117
      %v1636 = vmul.f32 %v1118, %v1118
      %v1637 = vmul.f32 %v1119, %v1119
      %v1638 = vmul.f32 %v1120, %v1120
      %v1639 = vmul.f32 %v1121, %v1121
      %v1640 = vmul.f32 %v1122, %v1122
      %v1641 = vmul.f32 %v1123, %v1123
      %v1642 = vmul.f32 %v1124, %v1124
      %v1643 = vmul.f32 %v1125, %v1125
      %v1644 = vmul.f32 %v1126, %v1126
      %v1645 = vmul.f32 %v1127, %v1127
      %v1646 = vmul.f32 %v1128, %v1128
      %v1647 = vmul.f32 %v1129, %v1129
      %v1648 = vmul.f32 %v1130, %v1130
      %v1649 = vmul.f32 %v1131, %v1131
      %v1650 = vmul.f32 %v1132, %v1132
      %v1651 = vmul.f32 %v1133, %v1133
      %v1652 = vmul.f32 %v1134, %v1134
      %v1653 = vmul.f32 %v1135, %v1135
      %v1654 = vmul.f32 %v1136, %v1136
      %v1655 = vmul.f32 %v1137, %v1137
      %v1656 = vmul.f32 %v1138, %v1138
      %v1657 = vmul.f32 %v1139, %v1139
      %v1658 = vmul.f32 %v1140, %v1140
      %v1659 = vmul.f32 %v1141, %v1141
      %v1660 = vmul.f32 %v1142, %v1142
      %v1661 = vmul.f32 %v1143, %v1143
      %v1662 = vmul.f32 %v1144, %v1144
      %v1663 = vmul.f32 %v1145, %v1145
      %v1664 = vmul.f32 %v1146, %v1146
      %v1665 = vmul.f32 %v1147, %v1147
      %v1666 = vmul.f32 %v1148, %v1148
      %v1667 = vmul.f32 %v1149, %v1149
      %v1668 = vmul.f32 %v1150, %v1150
      %v1669 = vmul.f32 %v1151, %v1151
      %v1670 = vmul.f32 %v1152, %v1152
      %v1671 = vmul.f32 %v1153, %v1153
      %v1672 = vmul.f32 %v1154, %v1154
      %v1673 = vmul.f32 %v1155, %v1155
      %v1674 = vmul.f32 %v1156, %v1156
      %v1675 = vmul.f32 %v1157, %v1157
      %v1676 = vmul.f32 %v1158, %v1158
      %v1677 = vmul.f32 %v1159, %v1159
      %v1678 = vmul.f32 %v1160, %v1160
      %v1679 = vsel %vm1029, %v1615, 0.0
      %v1680 = vsel %vm1029, %v1616, 0.0
      %v1681 = vadd.f32 %v1679, %v1680
      %v1682 = vsel %vm1029, %v1617, 0.0
      %v1683 = vadd.f32 %v1681, %v1682
      %v1684 = vsel %vm1029, %v1618, 0.0
      %v1685 = vadd.f32 %v1683, %v1684
      %v1686 = vsel %vm1029, %v1619, 0.0
      %v1687 = vadd.f32 %v1685, %v1686
      %v1688 = vsel %vm1029, %v1620, 0.0
      %v1689 = vadd.f32 %v1687, %v1688
      %v1690 = vsel %vm1029, %v1621, 0.0
      %v1691 = vadd.f32 %v1689, %v1690
      %v1692 = vsel %vm1029, %v1622, 0.0
      %v1693 = vadd.f32 %v1691, %v1692
      %v1694 = vsel %vm1029, %v1623, 0.0
      %v1695 = vadd.f32 %v1693, %v1694
      %v1696 = vsel %vm1029, %v1624, 0.0
      %v1697 = vadd.f32 %v1695, %v1696
      %v1698 = vsel %vm1029, %v1625, 0.0
      %v1699 = vadd.f32 %v1697, %v1698
      %v1700 = vsel %vm1029, %v1626, 0.0
      %v1701 = vadd.f32 %v1699, %v1700
      %v1702 = vsel %vm1029, %v1627, 0.0
      %v1703 = vadd.f32 %v1701, %v1702
      %v1704 = vsel %vm1029, %v1628, 0.0
      %v1705 = vadd.f32 %v1703, %v1704
      %v1706 = vsel %vm1029, %v1629, 0.0
      %v1707 = vadd.f32 %v1705, %v1706
      %v1708 = vsel %vm1029, %v1630, 0.0
      %v1709 = vadd.f32 %v1707, %v1708
      %v1710 = vsel %vm1029, %v1631, 0.0
      %v1711 = vadd.f32 %v1709, %v1710
      %v1712 = vsel %vm1029, %v1632, 0.0
      %v1713 = vadd.f32 %v1711, %v1712
      %v1714 = vsel %vm1029, %v1633, 0.0
      %v1715 = vadd.f32 %v1713, %v1714
      %v1716 = vsel %vm1029, %v1634, 0.0
      %v1717 = vadd.f32 %v1715, %v1716
      %v1718 = vsel %vm1029, %v1635, 0.0
      %v1719 = vadd.f32 %v1717, %v1718
      %v1720 = vsel %vm1029, %v1636, 0.0
      %v1721 = vadd.f32 %v1719, %v1720
      %v1722 = vsel %vm1029, %v1637, 0.0
      %v1723 = vadd.f32 %v1721, %v1722
      %v1724 = vsel %vm1029, %v1638, 0.0
      %v1725 = vadd.f32 %v1723, %v1724
      %v1726 = vsel %vm1029, %v1639, 0.0
      %v1727 = vadd.f32 %v1725, %v1726
      %v1728 = vsel %vm1029, %v1640, 0.0
      %v1729 = vadd.f32 %v1727, %v1728
      %v1730 = vsel %vm1029, %v1641, 0.0
      %v1731 = vadd.f32 %v1729, %v1730
      %v1732 = vsel %vm1029, %v1642, 0.0
      %v1733 = vadd.f32 %v1731, %v1732
      %v1734 = vsel %vm1029, %v1643, 0.0
      %v1735 = vadd.f32 %v1733, %v1734
      %v1736 = vsel %vm1029, %v1644, 0.0
      %v1737 = vadd.f32 %v1735, %v1736
      %v1738 = vsel %vm1029, %v1645, 0.0
      %v1739 = vadd.f32 %v1737, %v1738
      %v1740 = vsel %vm1029, %v1646, 0.0
      %v1741 = vadd.f32 %v1739, %v1740
      %v1742 = vsel %vm1029, %v1647, 0.0
      %v1743 = vadd.f32 %v1741, %v1742
      %v1744 = vsel %vm1029, %v1648, 0.0
      %v1745 = vadd.f32 %v1743, %v1744
      %v1746 = vsel %vm1029, %v1649, 0.0
      %v1747 = vadd.f32 %v1745, %v1746
      %v1748 = vsel %vm1029, %v1650, 0.0
      %v1749 = vadd.f32 %v1747, %v1748
      %v1750 = vsel %vm1029, %v1651, 0.0
      %v1751 = vadd.f32 %v1749, %v1750
      %v1752 = vsel %vm1029, %v1652, 0.0
      %v1753 = vadd.f32 %v1751, %v1752
      %v1754 = vsel %vm1029, %v1653, 0.0
      %v1755 = vadd.f32 %v1753, %v1754
      %v1756 = vsel %vm1029, %v1654, 0.0
      %v1757 = vadd.f32 %v1755, %v1756
      %v1758 = vsel %vm1029, %v1655, 0.0
      %v1759 = vadd.f32 %v1757, %v1758
      %v1760 = vsel %vm1029, %v1656, 0.0
      %v1761 = vadd.f32 %v1759, %v1760
      %v1762 = vsel %vm1029, %v1657, 0.0
      %v1763 = vadd.f32 %v1761, %v1762
      %v1764 = vsel %vm1029, %v1658, 0.0
      %v1765 = vadd.f32 %v1763, %v1764
      %v1766 = vsel %vm1029, %v1659, 0.0
      %v1767 = vadd.f32 %v1765, %v1766
      %v1768 = vsel %vm1029, %v1660, 0.0
      %v1769 = vadd.f32 %v1767, %v1768
      %v1770 = vsel %vm1029, %v1661, 0.0
      %v1771 = vadd.f32 %v1769, %v1770
      %v1772 = vsel %vm1029, %v1662, 0.0
      %v1773 = vadd.f32 %v1771, %v1772
      %v1774 = vsel %vm1029, %v1663, 0.0
      %v1775 = vadd.f32 %v1773, %v1774
      %v1776 = vsel %vm1029, %v1664, 0.0
      %v1777 = vadd.f32 %v1775, %v1776
      %v1778 = vsel %vm1029, %v1665, 0.0
      %v1779 = vadd.f32 %v1777, %v1778
      %v1780 = vsel %vm1029, %v1666, 0.0
      %v1781 = vadd.f32 %v1779, %v1780
      %v1782 = vsel %vm1029, %v1667, 0.0
      %v1783 = vadd.f32 %v1781, %v1782
      %v1784 = vsel %vm1029, %v1668, 0.0
      %v1785 = vadd.f32 %v1783, %v1784
      %v1786 = vsel %vm1029, %v1669, 0.0
      %v1787 = vadd.f32 %v1785, %v1786
      %v1788 = vsel %vm1029, %v1670, 0.0
      %v1789 = vadd.f32 %v1787, %v1788
      %v1790 = vsel %vm1029, %v1671, 0.0
      %v1791 = vadd.f32 %v1789, %v1790
      %v1792 = vsel %vm1029, %v1672, 0.0
      %v1793 = vadd.f32 %v1791, %v1792
      %v1794 = vsel %vm1029, %v1673, 0.0
      %v1795 = vadd.f32 %v1793, %v1794
      %v1796 = vsel %vm1029, %v1674, 0.0
      %v1797 = vadd.f32 %v1795, %v1796
      %v1798 = vsel %vm1029, %v1675, 0.0
      %v1799 = vadd.f32 %v1797, %v1798
      %v1800 = vsel %vm1029, %v1676, 0.0
      %v1801 = vadd.f32 %v1799, %v1800
      %v1802 = vsel %vm1029, %v1677, 0.0
      %v1803 = vadd.f32 %v1801, %v1802
      %v1804 = vsel %vm1029, %v1678, 0.0
      %v1805 = vadd.f32 %v1803, %v1804
      %v1806 = vrot.slane %v1805, 4
      %v1807 = vadd.f32 %v1805, %v1806
      %v1808 = vrot.slane %v1807, 2
      %v1809 = vadd.f32 %v1807, %v1808
      %v1810 = vrot.slane %v1809, 1
      %v1811 = vadd.f32 %v1809, %v1810
      %1812 = vst.msk [vmem:[#allocation6] sm:$0xff] %vm1029, %v1614
      %1813 = vst.msk [vmem:[#allocation7] sm:$0xff] %vm1029, %v1811
    $region21: #{tpu_custom_call.1} parent=1 // pred_fallthru
      _
    // Predicated region
    $region22: #{tpu_custom_call.1} parent=1 // pred_check
      _
    $region23: #{tpu_custom_call.1} parent=1 // pred_check_branch
      %1815 = sbr.rel (0) target = $region25
    $region24: #{tpu_custom_call.1} parent=1 // pred_region
      _
    $region25: #{tpu_custom_call.1} parent=1 // pred_fallthru
      _
    // Predicated region
    $region26: #{tpu_custom_call.1} parent=1 // pred_check
      _
    $region27: #{tpu_custom_call.1} parent=1 // pred_check_branch
      %1817 = sbr.rel (0) target = $region29
    $region28: #{tpu_custom_call.1} parent=1 // pred_region
      %s1819 = ssub.s32 128, 128
      %1820 = vsyncadd [#allocation5], %s1819
      %s1822 = sshll.u32 [#allocation6], 4
      %s1823 = int_to_ptr.vmem [resolvable:$true] %s1822
      %1825 = dma.vmem_to_hbm [thread:$0]  %s1823, 128, %s3, [#allocation5]
    $region29: #{tpu_custom_call.1} parent=1 // pred_fallthru
      _
    // Predicated region
    $region30: #{tpu_custom_call.1} parent=1 // pred_check
      _
    $region31: #{tpu_custom_call.1} parent=1 // pred_check_branch
      %1827 = sbr.rel (0) target = $region33
    $region32: #{tpu_custom_call.1} parent=1 // pred_region
      %s1829 = ssub.s32 128, 128
      %1830 = vsyncadd [#allocation8], %s1829
      %s1832 = sshll.u32 [#allocation7], 4
      %s1833 = int_to_ptr.vmem [resolvable:$true] %s1832
      %1835 = dma.vmem_to_hbm [thread:$0]  %s1833, 128, %s4, [#allocation8]
    $region33: #{tpu_custom_call.1} parent=1 // pred_fallthru
      _
    // Predicated region
    $region34: #{tpu_custom_call.1} parent=1 // pred_check
      _
    $region35: #{tpu_custom_call.1} parent=1 // pred_check_branch
      %1837 = sbr.rel (0) target = $region37
    $region36: #{tpu_custom_call.1} parent=1 // pred_region
      _
    $region37: #{tpu_custom_call.1} parent=1 // pred_fallthru
      _
    // Predicated region
    $region38: #{tpu_custom_call.1} parent=1 // pred_check
      _
    $region39: #{tpu_custom_call.1} parent=1 // pred_check_branch
      %1839 = sbr.rel (0) target = $region41
    $region40: #{tpu_custom_call.1} parent=1 // pred_region
      %1840 = dma.done [#allocation5], 128
    $region41: #{tpu_custom_call.1} parent=1 // pred_fallthru
      _
    // Predicated region
    $region42: #{tpu_custom_call.1} parent=1 // pred_check
      _
    $region43: #{tpu_custom_call.1} parent=1 // pred_check_branch
      %1842 = sbr.rel (0) target = $region45
    $region44: #{tpu_custom_call.1} parent=1 // pred_region
      %1843 = dma.done [#allocation8], 128
    $region45: #{tpu_custom_call.1} parent=1 // pred_fallthru
      _
    %1844 = vsyncpa [#allocation4], 1
    %1845 = vsyncpa [#allocation5], 1
    %1846 = vsyncpa [#allocation8], 1

</llo_original>
